<compile_context>
chip_gen: v5e
topology: v5e:2x2
jax: 0.10.0
libtpu: 0.0.40
codegen_flags: <defaults>
</compile_context>

<pallas_src>
import functools

import jax
import jax.numpy as jnp
from jax.experimental import pallas as pl
from jax.experimental.pallas import tpu as pltpu  # noqa: F401  (TPU backend)

# ---------------- "opt" configuration ----------------
USER_DIM = 32      # opt.user_dim
CAT_DIM = 16       # opt.cat_dim
TITLE_DIM = 32     # stand-in title feature width (sublane/MXU aligned)
ATTN_DIM = 16      # attention width of the (stand-in) user encoder
N_CAT_VOCAB = 16
N_SUB_VOCAB = 32
ALPHA = 0.5        # opt.alpha
BETA = 0.5         # opt.beta
GAMMA = 1.0        # opt.gamma
DT = "large"       # opt.dt
ENC = "glove"      # opt.enc

# ---------------- example sizes ----------------
B = 2
N_CLICK = 8
N_CAND = 4


# =========================================================================
# Fused Pallas kernel: entire HPDM forward (dt='large', infer=False path)
# =========================================================================

def _hpdm_fused_kernel(B_, NK, NC, DU, DC, VC, VS, alpha, beta, gamma,
                       titles_ref, cc_ref, cs_ref, ccat_ref, csub_ref,
                       clicks_ref, imprs_ref,
                       wt_ref, bt_ref, cat_emb_ref, sub_emb_ref,
                       ue_np_ref, ue_nu_ref, ue_cp_ref, ue_cu_ref,
                       wn_ref, wc_ref, bias4_ref, wcf_n_ref, wcf_c_ref,
                       bcf_ref, o_ref):
    f32 = jnp.float32
    BNK = B_ * NK
    BNC = B_ * NC

    # ---------------- dt == 'large' popularity mask ----------------------
    cc = cc_ref[...]                                        # (BNK, 1) int32
    cs = cs_ref[...]                                        # (BNK, 1) int32
    mask = ((cc == 1) | (cc == 2) | (cc == 4)).astype(jnp.int32)
    inv = 1 - mask
    fm = mask.astype(f32)                                   # (BNK, 1)
    fim = inv.astype(f32)

    # ---------------- news encoder: title -> news vec (one MXU matmul) ---
    bt = bt_ref[...]                                        # (1, DU)
    proj = jnp.dot(titles_ref[...], wt_ref[...],
                   preferred_element_type=f32)              # (BNK+BNC, DU)
    proj_click = proj[0:BNK]                                # (BNK, DU)
    proj_cand = proj[BNK:BNK + BNC]                         # (BNC, DU)
    # (x * m) @ W == m * (x @ W)  for a per-row scalar mask m.
    click_news_pop = jnp.tanh(fm * proj_click + bt)
    click_news_unpop = jnp.tanh(fim * proj_click + bt)
    cand_news = jnp.tanh(proj_cand + bt)

    # --------- news encoder: (cat, sub) -> cat vec (in-kernel gather) ----
    cat_emb = cat_emb_ref[...]                              # (VC, DC)
    sub_emb = sub_emb_ref[...]                              # (VS, DC)

    def embed(idx, table, vocab):
        # one-hot matmul gather; masked indices are 0 => embedding row 0,
        # matching the PyTorch `cat * mask` semantics.
        rows = idx.shape[0]
        iota = jax.lax.broadcasted_iota(jnp.int32, (rows, vocab), 1)
        onehot = (idx == iota).astype(f32)                  # (rows, vocab)
        return jnp.dot(onehot, table, preferred_element_type=f32)

    click_cat_pop = jnp.tanh(embed(cc * mask, cat_emb, VC)
                             + embed(cs * mask, sub_emb, VS))
    click_cat_unpop = jnp.tanh(embed(cc * inv, cat_emb, VC)
                               + embed(cs * inv, sub_emb, VS))
    cand_cat = jnp.tanh(embed(ccat_ref[...], cat_emb, VC)
                        + embed(csub_ref[...], sub_emb, VS))

    # ------------- user encoders: additive attention pooling -------------
    def attend_pool(x, ue, d):
        # x: (BNK, d); ue rows [0:d] = Wa, row d = ba, row d+8 = q^T
        wa = ue[0:d]                                        # (d, Da)
        ba = ue[d:d + 1]                                    # (1, Da)
        qt = ue[d + 8:d + 9]                                # (1, Da)
        h = jnp.tanh(jnp.dot(x, wa, preferred_element_type=f32) + ba)
        s = jnp.sum(h * qt, axis=-1, keepdims=True)         # (BNK, 1) VPU+XLU
        rows = []
        for b in range(B_):                                 # unrolled (B_ tiny)
            sb = s[b * NK:(b + 1) * NK]                     # (NK, 1)
            xb = x[b * NK:(b + 1) * NK]                     # (NK, d)
            m = jnp.max(sb, axis=0, keepdims=True)
            e = jnp.exp(sb - m)
            a = e / jnp.sum(e, axis=0, keepdims=True)       # (NK, 1)
            rows.append(jnp.sum(a * xb, axis=0, keepdims=True))   # (1, d)
        return jnp.concatenate(rows, axis=0)                # (B_, d)

    u_np = attend_pool(click_news_pop, ue_np_ref[...], DU)  # (B_, DU)
    u_nu = attend_pool(click_news_unpop, ue_nu_ref[...], DU)
    u_cp = attend_pool(click_cat_pop, ue_cp_ref[...], DC)   # (B_, DC)
    u_cu = attend_pool(click_cat_unpop, ue_cu_ref[...], DC)

    # ------------- counterfactual: cf_loss + propensity score ------------
    bcf = bcf_ref[...]                                      # (1, 2)
    n2p = jnp.sum(u_np * wcf_n_ref[...], axis=-1, keepdims=True) + bcf[0, 0]
    c2p = jnp.sum(u_cp * wcf_c_ref[...], axis=-1, keepdims=True) + bcf[0, 1]
    cf = alpha * n2p + beta * c2p                           # (B_, 1)

    wclk = clicks_ref[...] * fim                            # (BNK, 1)
    wimp = imprs_ref[...] * fim
    cps, ips = [], []
    for b in range(B_):
        cps.append(jnp.sum(wclk[b * NK:(b + 1) * NK], axis=0, keepdims=True))
        ips.append(jnp.sum(wimp[b * NK:(b + 1) * NK], axis=0, keepdims=True))
    click_pro = jnp.concatenate(cps, axis=0) + 1.0          # (B_, 1)
    imprs_pro = jnp.concatenate(ips, axis=0) + 1.0
    ratio = imprs_pro / click_pro - 1.0
    if gamma == 1.0:                                        # trace-time special case
        ps = ratio
    else:                                                   # guarded pow
        ps = jnp.exp(gamma * jnp.log(jnp.maximum(ratio, 1e-12)))

    # --------- gating softmax over (news_pop, news_unpop, cat_pop, cat_unpop)
    # (same ordering as the torch.cat in compute_score)
    wn = wn_ref[...]                                        # (2, DU) pop/unpop
    wc = wc_ref[...]                                        # (2, DC)
    b4 = bias4_ref[...]                                     # (1, 4)
    l_np = jnp.sum(u_np * wn[0:1], axis=-1, keepdims=True) + b4[0, 0]
    l_nu = jnp.sum(u_nu * wn[1:2], axis=-1, keepdims=True) + b4[0, 1]
    l_cp = jnp.sum(u_cp * wc[0:1], axis=-1, keepdims=True) + b4[0, 2]
    l_cu = jnp.sum(u_cu * wc[1:2], axis=-1, keepdims=True) + b4[0, 3]
    m4 = jnp.maximum(jnp.maximum(l_np, l_nu), jnp.maximum(l_cp, l_cu))
    e_np = jnp.exp(l_np - m4)
    e_nu = jnp.exp(l_nu - m4)
    e_cp = jnp.exp(l_cp - m4)
    e_cu = jnp.exp(l_cu - m4)
    inv_z = 1.0 / (e_np + e_nu + e_cp + e_cu)

    # Fold softmax weights + ipw scaling into combined user vectors:
    # final[b,c] = cand_news[b,c].(w_np*u_np + w_nu*ipw*u_nu)
    #            + cand_cat [b,c].(w_cp*u_cp + w_cu*ipw*u_cu)
    v_news = (e_np * u_np + (e_nu * ps) * u_nu) * inv_z     # (B_, DU)
    v_cat = (e_cp * u_cp + (e_cu * ps) * u_cu) * inv_z      # (B_, DC)

    # ---------------- packed, lane-padded output --------------------------
    o_ref[...] = jnp.zeros((B_, 128), f32)
    for b in range(B_):                                     # unrolled (B_ tiny)
        cn_b = cand_news[b * NC:(b + 1) * NC]               # (NC, DU)
        ct_b = cand_cat[b * NC:(b + 1) * NC]                # (NC, DC)
        fin_b = (jnp.sum(cn_b * v_news[b:b + 1], axis=-1)
                 + jnp.sum(ct_b * v_cat[b:b + 1], axis=-1)) # (NC,)
        o_ref[b, 0:NC] = fin_b
    o_ref[:, NC:NC + 1] = cf                                # cf_loss in lane NC


# =========================================================================
# Wrapper (pure layout / parameter-packing glue; constant-folded under jit)
# =========================================================================

def _pack_user_encoder(ue_params, d):
    """Pack (Wa[d,Da], ba[Da], q[Da,1]) into a (d+16, Da) sublane-aligned slab."""
    wa, ba, q = ue_params
    buf = jnp.zeros((d + 16, ATTN_DIM), jnp.float32)
    buf = buf.at[0:d, :].set(wa)
    buf = buf.at[d, :].set(ba)
    buf = buf.at[d + 8, :].set(q[:, 0])
    return buf


def hpdm_forward(p, click_t, click_cat, click_sub,
                 candi_t, candi_cat, candi_sub, ipw_candi, ipw_click):
    del ipw_candi  # unused on the (dt='large', infer=False) training path
    bx, nk, td = click_t.shape
    nc = candi_t.shape[1]

    # --- fold batch onto sublanes (clicked + candidate titles share one matmul)
    titles = jnp.concatenate(
        [click_t.reshape(bx * nk, td), candi_t.reshape(bx * nc, td)],
        axis=0).astype(jnp.float32)                         # (B*Nk+B*Nc, Td)
    cc = click_cat.reshape(bx * nk, 1).astype(jnp.int32)
    cs = click_sub.reshape(bx * nk, 1).astype(jnp.int32)
    ccat = candi_cat.reshape(bx * nc, 1).astype(jnp.int32)
    csub = candi_sub.reshape(bx * nc, 1).astype(jnp.int32)
    clicks = ipw_click[:, :, 0].reshape(bx * nk, 1).astype(jnp.float32)
    imprs = ipw_click[:, :, 1].reshape(bx * nk, 1).astype(jnp.float32)

    # --- parameter packing (constants under jit) ---
    bt = p["b_t"].reshape(1, USER_DIM)
    ue_np = _pack_user_encoder(p["ue_news_pop"], USER_DIM)
    ue_nu = _pack_user_encoder(p["ue_news_unpop"], USER_DIM)
    ue_cp = _pack_user_encoder(p["ue_cat_pop"], CAT_DIM)
    ue_cu = _pack_user_encoder(p["ue_cat_unpop"], CAT_DIM)
    wn = jnp.stack([p["w_news_pop"], p["w_news_unpop"]], axis=0)   # (2, Du)
    wc = jnp.stack([p["w_cat_pop"], p["w_cat_unpop"]], axis=0)     # (2, Dc)
    bias4 = jnp.stack([p["b_news_pop"], p["b_news_unpop"],
                       p["b_cat_pop"], p["b_cat_unpop"]]).reshape(1, 4)
    wcf_n = p["w_cf_news"].reshape(1, USER_DIM)
    wcf_c = p["w_cf_cat"].reshape(1, CAT_DIM)
    bcf = jnp.stack([p["b_cf_news"], p["b_cf_cat"]]).reshape(1, 2)

    kern = functools.partial(
        _hpdm_fused_kernel, bx, nk, nc, USER_DIM, CAT_DIM,
        N_CAT_VOCAB, N_SUB_VOCAB, ALPHA, BETA, GAMMA)

    # Single fused pallas_call; every operand is a whole-array VMEM block and
    # the only HBM writeback is one lane-padded (B, 128) slab.
    out = pl.pallas_call(
        kern,
        out_shape=jax.ShapeDtypeStruct((bx, 128), jnp.float32),
    )(titles, cc, cs, ccat, csub, clicks, imprs,
      p["W_t"], bt, p["cat_emb"], p["sub_emb"],
      ue_np, ue_nu, ue_cp, ue_cu,
      wn, wc, bias4, wcf_n, wcf_c, bcf)

    final_score = out[:, :nc]          # (B, N_cand) == final_score.squeeze(-1)
    cf_loss = out[:, nc]               # (B,)
    return final_score, cf_loss


# =========================================================================
# Deterministic parameter init
# =========================================================================

def init_params(key):
    ks = jax.random.split(key, 24)

    def nrm(k, shape, scale=0.1):
        return scale * jax.random.normal(k, shape, jnp.float32)

    p = {}
    p["W_t"] = nrm(ks[0], (TITLE_DIM, USER_DIM))
    p["b_t"] = nrm(ks[1], (USER_DIM,))
    p["cat_emb"] = nrm(ks[2], (N_CAT_VOCAB, CAT_DIM))
    p["sub_emb"] = nrm(ks[3], (N_SUB_VOCAB, CAT_DIM))

    def ue(k, d):
        k1, k2, k3 = jax.random.split(k, 3)
        return (nrm(k1, (d, ATTN_DIM)), nrm(k2, (ATTN_DIM,)),
                nrm(k3, (ATTN_DIM, 1)))

    p["ue_news_pop"] = ue(ks[4], USER_DIM)
    p["ue_cat_pop"] = ue(ks[5], CAT_DIM)
    p["ue_news_unpop"] = ue(ks[6], USER_DIM)
    p["ue_cat_unpop"] = ue(ks[7], CAT_DIM)

    p["w_news_pop"] = nrm(ks[8], (USER_DIM,))
    p["b_news_pop"] = nrm(ks[9], ())
    p["w_cat_pop"] = nrm(ks[10], (CAT_DIM,))
    p["b_cat_pop"] = nrm(ks[11], ())
    p["w_news_unpop"] = nrm(ks[12], (USER_DIM,))
    p["b_news_unpop"] = nrm(ks[13], ())
    p["w_cat_unpop"] = nrm(ks[14], (CAT_DIM,))
    p["b_cat_unpop"] = nrm(ks[15], ())

    p["w_cf_news"] = nrm(ks[16], (USER_DIM, 1))
    p["b_cf_news"] = nrm(ks[17], ())
    p["w_cf_cat"] = nrm(ks[18], (CAT_DIM, 1))
    p["b_cf_cat"] = nrm(ks[19], ())
    return p


# =========================================================================
# Main
# =========================================================================

if __name__ == "__main__":
    params = init_params(jax.random.PRNGKey(42))

    key = jax.random.PRNGKey(0)
    ks = jax.random.split(key, 9)
    click_t = jax.random.normal(ks[0], (B, N_CLICK, TITLE_DIM), jnp.float32)
    click_cat = jax.random.randint(ks[1], (B, N_CLICK), 0, 8)
    click_sub = jax.random.randint(ks[2], (B, N_CLICK), 0, N_SUB_VOCAB)
    candi_t = jax.random.normal(ks[3], (B, N_CAND, TITLE_DIM), jnp.float32)
    candi_cat = jax.random.randint(ks[4], (B, N_CAND), 0, 8)
    candi_sub = jax.random.randint(ks[5], (B, N_CAND), 0, N_SUB_VOCAB)
    clicks = jax.random.uniform(ks[6], (B, N_CLICK), minval=0.0, maxval=5.0)
    imprs = clicks + jax.random.uniform(ks[7], (B, N_CLICK), minval=1.0, maxval=10.0)
    ipw_click = jnp.stack([clicks, imprs], axis=-1)          # [B, N_CLICK, 2]
    ipw_candi = jax.random.uniform(ks[8], (B, N_CAND, 2), minval=0.0, maxval=10.0)

    fwd = jax.jit(functools.partial(hpdm_forward, params))
    final_score, cf_loss = fwd(click_t, click_cat, click_sub,
                               candi_t, candi_cat, candi_sub,
                               ipw_candi, ipw_click)
    jax.block_until_ready((final_score, cf_loss))

    assert final_score.shape == (B, N_CAND), final_score.shape
    assert cf_loss.shape == (B,), cf_loss.shape
    assert bool(jnp.all(jnp.isfinite(final_score))) and bool(jnp.all(jnp.isfinite(cf_loss)))
    print("KERNEL_OK")
</pallas_src>

<mosaic_0001>
module attributes {stable_mosaic.version = 11 : i64} {
  func.func @_hpdm_fused_kernel(%arg0: memref<24x32xf32, #tpu.memory_space<vmem>>, %arg1: memref<16x1xi32, #tpu.memory_space<vmem>>, %arg2: memref<16x1xi32, #tpu.memory_space<vmem>>, %arg3: memref<8x1xi32, #tpu.memory_space<vmem>>, %arg4: memref<8x1xi32, #tpu.memory_space<vmem>>, %arg5: memref<16x1xf32, #tpu.memory_space<vmem>>, %arg6: memref<16x1xf32, #tpu.memory_space<vmem>>, %arg7: memref<32x32xf32, #tpu.memory_space<vmem>>, %arg8: memref<1x32xf32, #tpu.memory_space<vmem>>, %arg9: memref<16x16xf32, #tpu.memory_space<vmem>>, %arg10: memref<32x16xf32, #tpu.memory_space<vmem>>, %arg11: memref<48x16xf32, #tpu.memory_space<vmem>>, %arg12: memref<48x16xf32, #tpu.memory_space<vmem>>, %arg13: memref<32x16xf32, #tpu.memory_space<vmem>>, %arg14: memref<32x16xf32, #tpu.memory_space<vmem>>, %arg15: memref<2x32xf32, #tpu.memory_space<vmem>>, %arg16: memref<2x16xf32, #tpu.memory_space<vmem>>, %arg17: memref<1x4xf32, #tpu.memory_space<vmem>>, %arg18: memref<1x32xf32, #tpu.memory_space<vmem>>, %arg19: memref<1x16xf32, #tpu.memory_space<vmem>>, %arg20: memref<1x2xf32, #tpu.memory_space<vmem>>, %arg21: memref<2x128xf32, #tpu.memory_space<vmem>>) attributes {dimension_semantics = [], scalar_prefetch = 0 : i64, scratch_operands = 0 : i64, tpu.core_type = #tpu.core_type<tc>} {
    %c0 = arith.constant 0 : index
    %c0_0 = arith.constant 0 : index
    %0 = vector.load %arg1[%c0, %c0_0] : memref<16x1xi32, #tpu.memory_space<vmem>>, vector<16x1xi32>
    %c0_1 = arith.constant 0 : index
    %c0_2 = arith.constant 0 : index
    %1 = vector.load %arg2[%c0_1, %c0_2] : memref<16x1xi32, #tpu.memory_space<vmem>>, vector<16x1xi32>
    %c1_i32 = arith.constant 1 : i32
    %2 = vector.broadcast %c1_i32 : i32 to vector<16x1xi32>
    %3 = arith.cmpi eq, %0, %2 : vector<16x1xi32>
    %c2_i32 = arith.constant 2 : i32
    %4 = vector.broadcast %c2_i32 : i32 to vector<16x1xi32>
    %5 = arith.cmpi eq, %0, %4 : vector<16x1xi32>
    %6 = arith.ori %3, %5 : vector<16x1xi1>
    %c4_i32 = arith.constant 4 : i32
    %7 = vector.broadcast %c4_i32 : i32 to vector<16x1xi32>
    %8 = arith.cmpi eq, %0, %7 : vector<16x1xi32>
    %9 = arith.ori %6, %8 : vector<16x1xi1>
    %10 = arith.extui %9 : vector<16x1xi1> to vector<16x1xi32>
    %c1_i32_3 = arith.constant 1 : i32
    %11 = vector.broadcast %c1_i32_3 : i32 to vector<16x1xi32>
    %12 = arith.subi %11, %10 : vector<16x1xi32>
    %13 = arith.sitofp %10 : vector<16x1xi32> to vector<16x1xf32>
    %14 = arith.sitofp %12 : vector<16x1xi32> to vector<16x1xf32>
    %c0_4 = arith.constant 0 : index
    %c0_5 = arith.constant 0 : index
    %15 = vector.load %arg8[%c0_4, %c0_5] : memref<1x32xf32, #tpu.memory_space<vmem>>, vector<1x32xf32>
    %c0_6 = arith.constant 0 : index
    %c0_7 = arith.constant 0 : index
    %16 = vector.load %arg0[%c0_6, %c0_7] : memref<24x32xf32, #tpu.memory_space<vmem>>, vector<24x32xf32>
    %c0_8 = arith.constant 0 : index
    %c0_9 = arith.constant 0 : index
    %17 = vector.load %arg7[%c0_8, %c0_9] : memref<32x32xf32, #tpu.memory_space<vmem>>, vector<32x32xf32>
    %cst = arith.constant dense<0.000000e+00> : vector<24x32xf32>
    %18 = tpu.matmul %16, %17, %cst {dimension_numbers = #tpu.dot_dimension_numbers<[1], [0], [0], [1], [0, 0, 1, 1], [], []>} : vector<24x32xf32>, vector<32x32xf32>, vector<24x32xf32> -> vector<24x32xf32>
    %19 = vector.extract_strided_slice %18 {offsets = [0, 0], sizes = [16, 32], strides = [1, 1]} : vector<24x32xf32> to vector<16x32xf32>
    %20 = vector.extract_strided_slice %18 {offsets = [16, 0], sizes = [8, 32], strides = [1, 1]} : vector<24x32xf32> to vector<8x32xf32>
    %21 = vector.broadcast %13 : vector<16x1xf32> to vector<16x32xf32>
    %22 = arith.mulf %21, %19 : vector<16x32xf32>
    %23 = vector.broadcast %15 : vector<1x32xf32> to vector<16x32xf32>
    %24 = arith.addf %22, %23 : vector<16x32xf32>
    %25 = math.tanh %24 : vector<16x32xf32>
    %26 = vector.broadcast %14 : vector<16x1xf32> to vector<16x32xf32>
    %27 = arith.mulf %26, %19 : vector<16x32xf32>
    %28 = vector.broadcast %15 : vector<1x32xf32> to vector<16x32xf32>
    %29 = arith.addf %27, %28 : vector<16x32xf32>
    %30 = math.tanh %29 : vector<16x32xf32>
    %31 = vector.broadcast %15 : vector<1x32xf32> to vector<8x32xf32>
    %32 = arith.addf %20, %31 : vector<8x32xf32>
    %33 = math.tanh %32 : vector<8x32xf32>
    %c0_10 = arith.constant 0 : index
    %c0_11 = arith.constant 0 : index
    %34 = vector.load %arg9[%c0_10, %c0_11] : memref<16x16xf32, #tpu.memory_space<vmem>>, vector<16x16xf32>
    %c0_12 = arith.constant 0 : index
    %c0_13 = arith.constant 0 : index
    %35 = vector.load %arg10[%c0_12, %c0_13] : memref<32x16xf32, #tpu.memory_space<vmem>>, vector<32x16xf32>
    %36 = arith.muli %0, %10 : vector<16x1xi32>
    %37 = tpu.iota {dimensions = array<i32: 1>} : vector<16x16xi32>
    %38 = vector.broadcast %36 : vector<16x1xi32> to vector<16x16xi32>
    %39 = arith.cmpi eq, %38, %37 : vector<16x16xi32>
    %40 = arith.extui %39 : vector<16x16xi1> to vector<16x16xi32>
    %41 = arith.sitofp %40 : vector<16x16xi32> to vector<16x16xf32>
    %cst_14 = arith.constant dense<0.000000e+00> : vector<16x16xf32>
    %42 = tpu.matmul %41, %34, %cst_14 {dimension_numbers = #tpu.dot_dimension_numbers<[1], [0], [0], [1], [0, 0, 1, 1], [], []>} : vector<16x16xf32>, vector<16x16xf32>, vector<16x16xf32> -> vector<16x16xf32>
    %43 = arith.muli %1, %10 : vector<16x1xi32>
    %44 = tpu.iota {dimensions = array<i32: 1>} : vector<16x32xi32>
    %45 = vector.broadcast %43 : vector<16x1xi32> to vector<16x32xi32>
    %46 = arith.cmpi eq, %45, %44 : vector<16x32xi32>
    %47 = arith.extui %46 : vector<16x32xi1> to vector<16x32xi32>
    %48 = arith.sitofp %47 : vector<16x32xi32> to vector<16x32xf32>
    %cst_15 = arith.constant dense<0.000000e+00> : vector<16x16xf32>
    %49 = tpu.matmul %48, %35, %cst_15 {dimension_numbers = #tpu.dot_dimension_numbers<[1], [0], [0], [1], [0, 0, 1, 1], [], []>} : vector<16x32xf32>, vector<32x16xf32>, vector<16x16xf32> -> vector<16x16xf32>
    %50 = arith.addf %42, %49 : vector<16x16xf32>
    %51 = math.tanh %50 : vector<16x16xf32>
    %52 = arith.muli %0, %12 : vector<16x1xi32>
    %53 = tpu.iota {dimensions = array<i32: 1>} : vector<16x16xi32>
    %54 = vector.broadcast %52 : vector<16x1xi32> to vector<16x16xi32>
    %55 = arith.cmpi eq, %54, %53 : vector<16x16xi32>
    %56 = arith.extui %55 : vector<16x16xi1> to vector<16x16xi32>
    %57 = arith.sitofp %56 : vector<16x16xi32> to vector<16x16xf32>
    %cst_16 = arith.constant dense<0.000000e+00> : vector<16x16xf32>
    %58 = tpu.matmul %57, %34, %cst_16 {dimension_numbers = #tpu.dot_dimension_numbers<[1], [0], [0], [1], [0, 0, 1, 1], [], []>} : vector<16x16xf32>, vector<16x16xf32>, vector<16x16xf32> -> vector<16x16xf32>
    %59 = arith.muli %1, %12 : vector<16x1xi32>
    %60 = tpu.iota {dimensions = array<i32: 1>} : vector<16x32xi32>
    %61 = vector.broadcast %59 : vector<16x1xi32> to vector<16x32xi32>
    %62 = arith.cmpi eq, %61, %60 : vector<16x32xi32>
    %63 = arith.extui %62 : vector<16x32xi1> to vector<16x32xi32>
    %64 = arith.sitofp %63 : vector<16x32xi32> to vector<16x32xf32>
    %cst_17 = arith.constant dense<0.000000e+00> : vector<16x16xf32>
    %65 = tpu.matmul %64, %35, %cst_17 {dimension_numbers = #tpu.dot_dimension_numbers<[1], [0], [0], [1], [0, 0, 1, 1], [], []>} : vector<16x32xf32>, vector<32x16xf32>, vector<16x16xf32> -> vector<16x16xf32>
    %66 = arith.addf %58, %65 : vector<16x16xf32>
    %67 = math.tanh %66 : vector<16x16xf32>
    %c0_18 = arith.constant 0 : index
    %c0_19 = arith.constant 0 : index
    %68 = vector.load %arg3[%c0_18, %c0_19] : memref<8x1xi32, #tpu.memory_space<vmem>>, vector<8x1xi32>
    %69 = tpu.iota {dimensions = array<i32: 1>} : vector<8x16xi32>
    %70 = vector.broadcast %68 : vector<8x1xi32> to vector<8x16xi32>
    %71 = arith.cmpi eq, %70, %69 : vector<8x16xi32>
    %72 = arith.extui %71 : vector<8x16xi1> to vector<8x16xi32>
    %73 = arith.sitofp %72 : vector<8x16xi32> to vector<8x16xf32>
    %cst_20 = arith.constant dense<0.000000e+00> : vector<8x16xf32>
    %74 = tpu.matmul %73, %34, %cst_20 {dimension_numbers = #tpu.dot_dimension_numbers<[1], [0], [0], [1], [0, 0, 1, 1], [], []>} : vector<8x16xf32>, vector<16x16xf32>, vector<8x16xf32> -> vector<8x16xf32>
    %c0_21 = arith.constant 0 : index
    %c0_22 = arith.constant 0 : index
    %75 = vector.load %arg4[%c0_21, %c0_22] : memref<8x1xi32, #tpu.memory_space<vmem>>, vector<8x1xi32>
    %76 = tpu.iota {dimensions = array<i32: 1>} : vector<8x32xi32>
    %77 = vector.broadcast %75 : vector<8x1xi32> to vector<8x32xi32>
    %78 = arith.cmpi eq, %77, %76 : vector<8x32xi32>
    %79 = arith.extui %78 : vector<8x32xi1> to vector<8x32xi32>
    %80 = arith.sitofp %79 : vector<8x32xi32> to vector<8x32xf32>
    %cst_23 = arith.constant dense<0.000000e+00> : vector<8x16xf32>
    %81 = tpu.matmul %80, %35, %cst_23 {dimension_numbers = #tpu.dot_dimension_numbers<[1], [0], [0], [1], [0, 0, 1, 1], [], []>} : vector<8x32xf32>, vector<32x16xf32>, vector<8x16xf32> -> vector<8x16xf32>
    %82 = arith.addf %74, %81 : vector<8x16xf32>
    %83 = math.tanh %82 : vector<8x16xf32>
    %c0_24 = arith.constant 0 : index
    %c0_25 = arith.constant 0 : index
    %84 = vector.load %arg11[%c0_24, %c0_25] : memref<48x16xf32, #tpu.memory_space<vmem>>, vector<48x16xf32>
    %85 = vector.extract_strided_slice %84 {offsets = [0, 0], sizes = [32, 16], strides = [1, 1]} : vector<48x16xf32> to vector<32x16xf32>
    %86 = vector.extract_strided_slice %84 {offsets = [32, 0], sizes = [1, 16], strides = [1, 1]} : vector<48x16xf32> to vector<1x16xf32>
    %87 = vector.extract_strided_slice %84 {offsets = [40, 0], sizes = [1, 16], strides = [1, 1]} : vector<48x16xf32> to vector<1x16xf32>
    %cst_26 = arith.constant dense<0.000000e+00> : vector<16x16xf32>
    %88 = tpu.matmul %25, %85, %cst_26 {dimension_numbers = #tpu.dot_dimension_numbers<[1], [0], [0], [1], [0, 0, 1, 1], [], []>} : vector<16x32xf32>, vector<32x16xf32>, vector<16x16xf32> -> vector<16x16xf32>
    %89 = vector.broadcast %86 : vector<1x16xf32> to vector<16x16xf32>
    %90 = arith.addf %88, %89 : vector<16x16xf32>
    %91 = math.tanh %90 : vector<16x16xf32>
    %92 = vector.broadcast %87 : vector<1x16xf32> to vector<16x16xf32>
    %93 = arith.mulf %91, %92 : vector<16x16xf32>
    %cst_27 = arith.constant dense<0.000000e+00> : vector<16xf32>
    %94 = vector.multi_reduction <add>, %93, %cst_27 [1] : vector<16x16xf32> to vector<16xf32>
    %95 = vector.shape_cast %94 : vector<16xf32> to vector<16x1xf32>
    %96 = vector.extract_strided_slice %95 {offsets = [0, 0], sizes = [8, 1], strides = [1, 1]} : vector<16x1xf32> to vector<8x1xf32>
    %97 = vector.extract_strided_slice %25 {offsets = [0, 0], sizes = [8, 32], strides = [1, 1]} : vector<16x32xf32> to vector<8x32xf32>
    %cst_28 = arith.constant dense<0xFF800000> : vector<1xf32>
    %98 = vector.multi_reduction <maximumf>, %96, %cst_28 [0] : vector<8x1xf32> to vector<1xf32>
    %99 = vector.shape_cast %98 : vector<1xf32> to vector<1x1xf32>
    %100 = vector.broadcast %99 : vector<1x1xf32> to vector<8x1xf32>
    %101 = arith.subf %96, %100 : vector<8x1xf32>
    %102 = math.exp %101 : vector<8x1xf32>
    %cst_29 = arith.constant dense<0.000000e+00> : vector<1xf32>
    %103 = vector.multi_reduction <add>, %102, %cst_29 [0] : vector<8x1xf32> to vector<1xf32>
    %104 = vector.shape_cast %103 : vector<1xf32> to vector<1x1xf32>
    %105 = vector.broadcast %104 : vector<1x1xf32> to vector<8x1xf32>
    %106 = arith.divf %102, %105 : vector<8x1xf32>
    %107 = vector.broadcast %106 : vector<8x1xf32> to vector<8x32xf32>
    %108 = arith.mulf %107, %97 : vector<8x32xf32>
    %cst_30 = arith.constant dense<0.000000e+00> : vector<32xf32>
    %109 = vector.multi_reduction <add>, %108, %cst_30 [0] : vector<8x32xf32> to vector<32xf32>
    %110 = vector.shape_cast %109 : vector<32xf32> to vector<1x32xf32>
    %111 = vector.extract_strided_slice %95 {offsets = [8, 0], sizes = [8, 1], strides = [1, 1]} : vector<16x1xf32> to vector<8x1xf32>
    %112 = vector.extract_strided_slice %25 {offsets = [8, 0], sizes = [8, 32], strides = [1, 1]} : vector<16x32xf32> to vector<8x32xf32>
    %cst_31 = arith.constant dense<0xFF800000> : vector<1xf32>
    %113 = vector.multi_reduction <maximumf>, %111, %cst_31 [0] : vector<8x1xf32> to vector<1xf32>
    %114 = vector.shape_cast %113 : vector<1xf32> to vector<1x1xf32>
    %115 = vector.broadcast %114 : vector<1x1xf32> to vector<8x1xf32>
    %116 = arith.subf %111, %115 : vector<8x1xf32>
    %117 = math.exp %116 : vector<8x1xf32>
    %cst_32 = arith.constant dense<0.000000e+00> : vector<1xf32>
    %118 = vector.multi_reduction <add>, %117, %cst_32 [0] : vector<8x1xf32> to vector<1xf32>
    %119 = vector.shape_cast %118 : vector<1xf32> to vector<1x1xf32>
    %120 = vector.broadcast %119 : vector<1x1xf32> to vector<8x1xf32>
    %121 = arith.divf %117, %120 : vector<8x1xf32>
    %122 = vector.broadcast %121 : vector<8x1xf32> to vector<8x32xf32>
    %123 = arith.mulf %122, %112 : vector<8x32xf32>
    %cst_33 = arith.constant dense<0.000000e+00> : vector<32xf32>
    %124 = vector.multi_reduction <add>, %123, %cst_33 [0] : vector<8x32xf32> to vector<32xf32>
    %125 = vector.shape_cast %124 : vector<32xf32> to vector<1x32xf32>
    %126 = tpu.concatenate %110, %125 in 0 : vector<1x32xf32>, vector<1x32xf32> -> vector<2x32xf32>
    %c0_34 = arith.constant 0 : index
    %c0_35 = arith.constant 0 : index
    %127 = vector.load %arg12[%c0_34, %c0_35] : memref<48x16xf32, #tpu.memory_space<vmem>>, vector<48x16xf32>
    %128 = vector.extract_strided_slice %127 {offsets = [0, 0], sizes = [32, 16], strides = [1, 1]} : vector<48x16xf32> to vector<32x16xf32>
    %129 = vector.extract_strided_slice %127 {offsets = [32, 0], sizes = [1, 16], strides = [1, 1]} : vector<48x16xf32> to vector<1x16xf32>
    %130 = vector.extract_strided_slice %127 {offsets = [40, 0], sizes = [1, 16], strides = [1, 1]} : vector<48x16xf32> to vector<1x16xf32>
    %cst_36 = arith.constant dense<0.000000e+00> : vector<16x16xf32>
    %131 = tpu.matmul %30, %128, %cst_36 {dimension_numbers = #tpu.dot_dimension_numbers<[1], [0], [0], [1], [0, 0, 1, 1], [], []>} : vector<16x32xf32>, vector<32x16xf32>, vector<16x16xf32> -> vector<16x16xf32>
    %132 = vector.broadcast %129 : vector<1x16xf32> to vector<16x16xf32>
    %133 = arith.addf %131, %132 : vector<16x16xf32>
    %134 = math.tanh %133 : vector<16x16xf32>
    %135 = vector.broadcast %130 : vector<1x16xf32> to vector<16x16xf32>
    %136 = arith.mulf %134, %135 : vector<16x16xf32>
    %cst_37 = arith.constant dense<0.000000e+00> : vector<16xf32>
    %137 = vector.multi_reduction <add>, %136, %cst_37 [1] : vector<16x16xf32> to vector<16xf32>
    %138 = vector.shape_cast %137 : vector<16xf32> to vector<16x1xf32>
    %139 = vector.extract_strided_slice %138 {offsets = [0, 0], sizes = [8, 1], strides = [1, 1]} : vector<16x1xf32> to vector<8x1xf32>
    %140 = vector.extract_strided_slice %30 {offsets = [0, 0], sizes = [8, 32], strides = [1, 1]} : vector<16x32xf32> to vector<8x32xf32>
    %cst_38 = arith.constant dense<0xFF800000> : vector<1xf32>
    %141 = vector.multi_reduction <maximumf>, %139, %cst_38 [0] : vector<8x1xf32> to vector<1xf32>
    %142 = vector.shape_cast %141 : vector<1xf32> to vector<1x1xf32>
    %143 = vector.broadcast %142 : vector<1x1xf32> to vector<8x1xf32>
    %144 = arith.subf %139, %143 : vector<8x1xf32>
    %145 = math.exp %144 : vector<8x1xf32>
    %cst_39 = arith.constant dense<0.000000e+00> : vector<1xf32>
    %146 = vector.multi_reduction <add>, %145, %cst_39 [0] : vector<8x1xf32> to vector<1xf32>
    %147 = vector.shape_cast %146 : vector<1xf32> to vector<1x1xf32>
    %148 = vector.broadcast %147 : vector<1x1xf32> to vector<8x1xf32>
    %149 = arith.divf %145, %148 : vector<8x1xf32>
    %150 = vector.broadcast %149 : vector<8x1xf32> to vector<8x32xf32>
    %151 = arith.mulf %150, %140 : vector<8x32xf32>
    %cst_40 = arith.constant dense<0.000000e+00> : vector<32xf32>
    %152 = vector.multi_reduction <add>, %151, %cst_40 [0] : vector<8x32xf32> to vector<32xf32>
    %153 = vector.shape_cast %152 : vector<32xf32> to vector<1x32xf32>
    %154 = vector.extract_strided_slice %138 {offsets = [8, 0], sizes = [8, 1], strides = [1, 1]} : vector<16x1xf32> to vector<8x1xf32>
    %155 = vector.extract_strided_slice %30 {offsets = [8, 0], sizes = [8, 32], strides = [1, 1]} : vector<16x32xf32> to vector<8x32xf32>
    %cst_41 = arith.constant dense<0xFF800000> : vector<1xf32>
    %156 = vector.multi_reduction <maximumf>, %154, %cst_41 [0] : vector<8x1xf32> to vector<1xf32>
    %157 = vector.shape_cast %156 : vector<1xf32> to vector<1x1xf32>
    %158 = vector.broadcast %157 : vector<1x1xf32> to vector<8x1xf32>
    %159 = arith.subf %154, %158 : vector<8x1xf32>
    %160 = math.exp %159 : vector<8x1xf32>
    %cst_42 = arith.constant dense<0.000000e+00> : vector<1xf32>
    %161 = vector.multi_reduction <add>, %160, %cst_42 [0] : vector<8x1xf32> to vector<1xf32>
    %162 = vector.shape_cast %161 : vector<1xf32> to vector<1x1xf32>
    %163 = vector.broadcast %162 : vector<1x1xf32> to vector<8x1xf32>
    %164 = arith.divf %160, %163 : vector<8x1xf32>
    %165 = vector.broadcast %164 : vector<8x1xf32> to vector<8x32xf32>
    %166 = arith.mulf %165, %155 : vector<8x32xf32>
    %cst_43 = arith.constant dense<0.000000e+00> : vector<32xf32>
    %167 = vector.multi_reduction <add>, %166, %cst_43 [0] : vector<8x32xf32> to vector<32xf32>
    %168 = vector.shape_cast %167 : vector<32xf32> to vector<1x32xf32>
    %169 = tpu.concatenate %153, %168 in 0 : vector<1x32xf32>, vector<1x32xf32> -> vector<2x32xf32>
    %c0_44 = arith.constant 0 : index
    %c0_45 = arith.constant 0 : index
    %170 = vector.load %arg13[%c0_44, %c0_45] : memref<32x16xf32, #tpu.memory_space<vmem>>, vector<32x16xf32>
    %171 = vector.extract_strided_slice %170 {offsets = [0, 0], sizes = [16, 16], strides = [1, 1]} : vector<32x16xf32> to vector<16x16xf32>
    %172 = vector.extract_strided_slice %170 {offsets = [16, 0], sizes = [1, 16], strides = [1, 1]} : vector<32x16xf32> to vector<1x16xf32>
    %173 = vector.extract_strided_slice %170 {offsets = [24, 0], sizes = [1, 16], strides = [1, 1]} : vector<32x16xf32> to vector<1x16xf32>
    %cst_46 = arith.constant dense<0.000000e+00> : vector<16x16xf32>
    %174 = tpu.matmul %51, %171, %cst_46 {dimension_numbers = #tpu.dot_dimension_numbers<[1], [0], [0], [1], [0, 0, 1, 1], [], []>} : vector<16x16xf32>, vector<16x16xf32>, vector<16x16xf32> -> vector<16x16xf32>
    %175 = vector.broadcast %172 : vector<1x16xf32> to vector<16x16xf32>
    %176 = arith.addf %174, %175 : vector<16x16xf32>
    %177 = math.tanh %176 : vector<16x16xf32>
    %178 = vector.broadcast %173 : vector<1x16xf32> to vector<16x16xf32>
    %179 = arith.mulf %177, %178 : vector<16x16xf32>
    %cst_47 = arith.constant dense<0.000000e+00> : vector<16xf32>
    %180 = vector.multi_reduction <add>, %179, %cst_47 [1] : vector<16x16xf32> to vector<16xf32>
    %181 = vector.shape_cast %180 : vector<16xf32> to vector<16x1xf32>
    %182 = vector.extract_strided_slice %181 {offsets = [0, 0], sizes = [8, 1], strides = [1, 1]} : vector<16x1xf32> to vector<8x1xf32>
    %183 = vector.extract_strided_slice %51 {offsets = [0, 0], sizes = [8, 16], strides = [1, 1]} : vector<16x16xf32> to vector<8x16xf32>
    %cst_48 = arith.constant dense<0xFF800000> : vector<1xf32>
    %184 = vector.multi_reduction <maximumf>, %182, %cst_48 [0] : vector<8x1xf32> to vector<1xf32>
    %185 = vector.shape_cast %184 : vector<1xf32> to vector<1x1xf32>
    %186 = vector.broadcast %185 : vector<1x1xf32> to vector<8x1xf32>
    %187 = arith.subf %182, %186 : vector<8x1xf32>
    %188 = math.exp %187 : vector<8x1xf32>
    %cst_49 = arith.constant dense<0.000000e+00> : vector<1xf32>
    %189 = vector.multi_reduction <add>, %188, %cst_49 [0] : vector<8x1xf32> to vector<1xf32>
    %190 = vector.shape_cast %189 : vector<1xf32> to vector<1x1xf32>
    %191 = vector.broadcast %190 : vector<1x1xf32> to vector<8x1xf32>
    %192 = arith.divf %188, %191 : vector<8x1xf32>
    %193 = vector.broadcast %192 : vector<8x1xf32> to vector<8x16xf32>
    %194 = arith.mulf %193, %183 : vector<8x16xf32>
    %cst_50 = arith.constant dense<0.000000e+00> : vector<16xf32>
    %195 = vector.multi_reduction <add>, %194, %cst_50 [0] : vector<8x16xf32> to vector<16xf32>
    %196 = vector.shape_cast %195 : vector<16xf32> to vector<1x16xf32>
    %197 = vector.extract_strided_slice %181 {offsets = [8, 0], sizes = [8, 1], strides = [1, 1]} : vector<16x1xf32> to vector<8x1xf32>
    %198 = vector.extract_strided_slice %51 {offsets = [8, 0], sizes = [8, 16], strides = [1, 1]} : vector<16x16xf32> to vector<8x16xf32>
    %cst_51 = arith.constant dense<0xFF800000> : vector<1xf32>
    %199 = vector.multi_reduction <maximumf>, %197, %cst_51 [0] : vector<8x1xf32> to vector<1xf32>
    %200 = vector.shape_cast %199 : vector<1xf32> to vector<1x1xf32>
    %201 = vector.broadcast %200 : vector<1x1xf32> to vector<8x1xf32>
    %202 = arith.subf %197, %201 : vector<8x1xf32>
    %203 = math.exp %202 : vector<8x1xf32>
    %cst_52 = arith.constant dense<0.000000e+00> : vector<1xf32>
    %204 = vector.multi_reduction <add>, %203, %cst_52 [0] : vector<8x1xf32> to vector<1xf32>
    %205 = vector.shape_cast %204 : vector<1xf32> to vector<1x1xf32>
    %206 = vector.broadcast %205 : vector<1x1xf32> to vector<8x1xf32>
    %207 = arith.divf %203, %206 : vector<8x1xf32>
    %208 = vector.broadcast %207 : vector<8x1xf32> to vector<8x16xf32>
    %209 = arith.mulf %208, %198 : vector<8x16xf32>
    %cst_53 = arith.constant dense<0.000000e+00> : vector<16xf32>
    %210 = vector.multi_reduction <add>, %209, %cst_53 [0] : vector<8x16xf32> to vector<16xf32>
    %211 = vector.shape_cast %210 : vector<16xf32> to vector<1x16xf32>
    %212 = tpu.concatenate %196, %211 in 0 : vector<1x16xf32>, vector<1x16xf32> -> vector<2x16xf32>
    %c0_54 = arith.constant 0 : index
    %c0_55 = arith.constant 0 : index
    %213 = vector.load %arg14[%c0_54, %c0_55] : memref<32x16xf32, #tpu.memory_space<vmem>>, vector<32x16xf32>
    %214 = vector.extract_strided_slice %213 {offsets = [0, 0], sizes = [16, 16], strides = [1, 1]} : vector<32x16xf32> to vector<16x16xf32>
    %215 = vector.extract_strided_slice %213 {offsets = [16, 0], sizes = [1, 16], strides = [1, 1]} : vector<32x16xf32> to vector<1x16xf32>
    %216 = vector.extract_strided_slice %213 {offsets = [24, 0], sizes = [1, 16], strides = [1, 1]} : vector<32x16xf32> to vector<1x16xf32>
    %cst_56 = arith.constant dense<0.000000e+00> : vector<16x16xf32>
    %217 = tpu.matmul %67, %214, %cst_56 {dimension_numbers = #tpu.dot_dimension_numbers<[1], [0], [0], [1], [0, 0, 1, 1], [], []>} : vector<16x16xf32>, vector<16x16xf32>, vector<16x16xf32> -> vector<16x16xf32>
    %218 = vector.broadcast %215 : vector<1x16xf32> to vector<16x16xf32>
    %219 = arith.addf %217, %218 : vector<16x16xf32>
    %220 = math.tanh %219 : vector<16x16xf32>
    %221 = vector.broadcast %216 : vector<1x16xf32> to vector<16x16xf32>
    %222 = arith.mulf %220, %221 : vector<16x16xf32>
    %cst_57 = arith.constant dense<0.000000e+00> : vector<16xf32>
    %223 = vector.multi_reduction <add>, %222, %cst_57 [1] : vector<16x16xf32> to vector<16xf32>
    %224 = vector.shape_cast %223 : vector<16xf32> to vector<16x1xf32>
    %225 = vector.extract_strided_slice %224 {offsets = [0, 0], sizes = [8, 1], strides = [1, 1]} : vector<16x1xf32> to vector<8x1xf32>
    %226 = vector.extract_strided_slice %67 {offsets = [0, 0], sizes = [8, 16], strides = [1, 1]} : vector<16x16xf32> to vector<8x16xf32>
    %cst_58 = arith.constant dense<0xFF800000> : vector<1xf32>
    %227 = vector.multi_reduction <maximumf>, %225, %cst_58 [0] : vector<8x1xf32> to vector<1xf32>
    %228 = vector.shape_cast %227 : vector<1xf32> to vector<1x1xf32>
    %229 = vector.broadcast %228 : vector<1x1xf32> to vector<8x1xf32>
    %230 = arith.subf %225, %229 : vector<8x1xf32>
    %231 = math.exp %230 : vector<8x1xf32>
    %cst_59 = arith.constant dense<0.000000e+00> : vector<1xf32>
    %232 = vector.multi_reduction <add>, %231, %cst_59 [0] : vector<8x1xf32> to vector<1xf32>
    %233 = vector.shape_cast %232 : vector<1xf32> to vector<1x1xf32>
    %234 = vector.broadcast %233 : vector<1x1xf32> to vector<8x1xf32>
    %235 = arith.divf %231, %234 : vector<8x1xf32>
    %236 = vector.broadcast %235 : vector<8x1xf32> to vector<8x16xf32>
    %237 = arith.mulf %236, %226 : vector<8x16xf32>
    %cst_60 = arith.constant dense<0.000000e+00> : vector<16xf32>
    %238 = vector.multi_reduction <add>, %237, %cst_60 [0] : vector<8x16xf32> to vector<16xf32>
    %239 = vector.shape_cast %238 : vector<16xf32> to vector<1x16xf32>
    %240 = vector.extract_strided_slice %224 {offsets = [8, 0], sizes = [8, 1], strides = [1, 1]} : vector<16x1xf32> to vector<8x1xf32>
    %241 = vector.extract_strided_slice %67 {offsets = [8, 0], sizes = [8, 16], strides = [1, 1]} : vector<16x16xf32> to vector<8x16xf32>
    %cst_61 = arith.constant dense<0xFF800000> : vector<1xf32>
    %242 = vector.multi_reduction <maximumf>, %240, %cst_61 [0] : vector<8x1xf32> to vector<1xf32>
    %243 = vector.shape_cast %242 : vector<1xf32> to vector<1x1xf32>
    %244 = vector.broadcast %243 : vector<1x1xf32> to vector<8x1xf32>
    %245 = arith.subf %240, %244 : vector<8x1xf32>
    %246 = math.exp %245 : vector<8x1xf32>
    %cst_62 = arith.constant dense<0.000000e+00> : vector<1xf32>
    %247 = vector.multi_reduction <add>, %246, %cst_62 [0] : vector<8x1xf32> to vector<1xf32>
    %248 = vector.shape_cast %247 : vector<1xf32> to vector<1x1xf32>
    %249 = vector.broadcast %248 : vector<1x1xf32> to vector<8x1xf32>
    %250 = arith.divf %246, %249 : vector<8x1xf32>
    %251 = vector.broadcast %250 : vector<8x1xf32> to vector<8x16xf32>
    %252 = arith.mulf %251, %241 : vector<8x16xf32>
    %cst_63 = arith.constant dense<0.000000e+00> : vector<16xf32>
    %253 = vector.multi_reduction <add>, %252, %cst_63 [0] : vector<8x16xf32> to vector<16xf32>
    %254 = vector.shape_cast %253 : vector<16xf32> to vector<1x16xf32>
    %255 = tpu.concatenate %239, %254 in 0 : vector<1x16xf32>, vector<1x16xf32> -> vector<2x16xf32>
    %c0_64 = arith.constant 0 : index
    %c0_65 = arith.constant 0 : index
    %256 = vector.load %arg20[%c0_64, %c0_65] : memref<1x2xf32, #tpu.memory_space<vmem>>, vector<1x2xf32>
    %c0_66 = arith.constant 0 : index
    %c0_67 = arith.constant 0 : index
    %257 = vector.load %arg18[%c0_66, %c0_67] : memref<1x32xf32, #tpu.memory_space<vmem>>, vector<1x32xf32>
    %258 = vector.broadcast %257 : vector<1x32xf32> to vector<2x32xf32>
    %259 = arith.mulf %126, %258 : vector<2x32xf32>
    %cst_68 = arith.constant dense<0.000000e+00> : vector<2xf32>
    %260 = vector.multi_reduction <add>, %259, %cst_68 [1] : vector<2x32xf32> to vector<2xf32>
    %261 = vector.shape_cast %260 : vector<2xf32> to vector<2x1xf32>
    %262 = vector.extract_strided_slice %256 {offsets = [0, 0], sizes = [1, 1], strides = [1, 1]} : vector<1x2xf32> to vector<1x1xf32>
    %263 = vector.extract %262[0, 0] : f32 from vector<1x1xf32>
    %264 = vector.broadcast %263 : f32 to vector<2x1xf32>
    %265 = arith.addf %261, %264 : vector<2x1xf32>
    %c0_69 = arith.constant 0 : index
    %c0_70 = arith.constant 0 : index
    %266 = vector.load %arg19[%c0_69, %c0_70] : memref<1x16xf32, #tpu.memory_space<vmem>>, vector<1x16xf32>
    %267 = vector.broadcast %266 : vector<1x16xf32> to vector<2x16xf32>
    %268 = arith.mulf %212, %267 : vector<2x16xf32>
    %cst_71 = arith.constant dense<0.000000e+00> : vector<2xf32>
    %269 = vector.multi_reduction <add>, %268, %cst_71 [1] : vector<2x16xf32> to vector<2xf32>
    %270 = vector.shape_cast %269 : vector<2xf32> to vector<2x1xf32>
    %271 = vector.extract_strided_slice %256 {offsets = [0, 1], sizes = [1, 1], strides = [1, 1]} : vector<1x2xf32> to vector<1x1xf32>
    %272 = vector.extract %271[0, 0] : f32 from vector<1x1xf32>
    %273 = vector.broadcast %272 : f32 to vector<2x1xf32>
    %274 = arith.addf %270, %273 : vector<2x1xf32>
    %cst_72 = arith.constant 5.000000e-01 : f32
    %275 = vector.broadcast %cst_72 : f32 to vector<2x1xf32>
    %276 = arith.mulf %275, %265 : vector<2x1xf32>
    %cst_73 = arith.constant 5.000000e-01 : f32
    %277 = vector.broadcast %cst_73 : f32 to vector<2x1xf32>
    %278 = arith.mulf %277, %274 : vector<2x1xf32>
    %279 = arith.addf %276, %278 : vector<2x1xf32>
    %c0_74 = arith.constant 0 : index
    %c0_75 = arith.constant 0 : index
    %280 = vector.load %arg5[%c0_74, %c0_75] : memref<16x1xf32, #tpu.memory_space<vmem>>, vector<16x1xf32>
    %281 = arith.mulf %280, %14 : vector<16x1xf32>
    %c0_76 = arith.constant 0 : index
    %c0_77 = arith.constant 0 : index
    %282 = vector.load %arg6[%c0_76, %c0_77] : memref<16x1xf32, #tpu.memory_space<vmem>>, vector<16x1xf32>
    %283 = arith.mulf %282, %14 : vector<16x1xf32>
    %284 = vector.extract_strided_slice %281 {offsets = [0, 0], sizes = [8, 1], strides = [1, 1]} : vector<16x1xf32> to vector<8x1xf32>
    %cst_78 = arith.constant dense<0.000000e+00> : vector<1xf32>
    %285 = vector.multi_reduction <add>, %284, %cst_78 [0] : vector<8x1xf32> to vector<1xf32>
    %286 = vector.shape_cast %285 : vector<1xf32> to vector<1x1xf32>
    %287 = vector.extract_strided_slice %283 {offsets = [0, 0], sizes = [8, 1], strides = [1, 1]} : vector<16x1xf32> to vector<8x1xf32>
    %cst_79 = arith.constant dense<0.000000e+00> : vector<1xf32>
    %288 = vector.multi_reduction <add>, %287, %cst_79 [0] : vector<8x1xf32> to vector<1xf32>
    %289 = vector.shape_cast %288 : vector<1xf32> to vector<1x1xf32>
    %290 = vector.extract_strided_slice %281 {offsets = [8, 0], sizes = [8, 1], strides = [1, 1]} : vector<16x1xf32> to vector<8x1xf32>
    %cst_80 = arith.constant dense<0.000000e+00> : vector<1xf32>
    %291 = vector.multi_reduction <add>, %290, %cst_80 [0] : vector<8x1xf32> to vector<1xf32>
    %292 = vector.shape_cast %291 : vector<1xf32> to vector<1x1xf32>
    %293 = vector.extract_strided_slice %283 {offsets = [8, 0], sizes = [8, 1], strides = [1, 1]} : vector<16x1xf32> to vector<8x1xf32>
    %cst_81 = arith.constant dense<0.000000e+00> : vector<1xf32>
    %294 = vector.multi_reduction <add>, %293, %cst_81 [0] : vector<8x1xf32> to vector<1xf32>
    %295 = vector.shape_cast %294 : vector<1xf32> to vector<1x1xf32>
    %296 = tpu.concatenate %286, %292 in 0 : vector<1x1xf32>, vector<1x1xf32> -> vector<2x1xf32>
    %cst_82 = arith.constant 1.000000e+00 : f32
    %297 = vector.broadcast %cst_82 : f32 to vector<2x1xf32>
    %298 = arith.addf %296, %297 : vector<2x1xf32>
    %299 = tpu.concatenate %289, %295 in 0 : vector<1x1xf32>, vector<1x1xf32> -> vector<2x1xf32>
    %cst_83 = arith.constant 1.000000e+00 : f32
    %300 = vector.broadcast %cst_83 : f32 to vector<2x1xf32>
    %301 = arith.addf %299, %300 : vector<2x1xf32>
    %302 = arith.divf %301, %298 : vector<2x1xf32>
    %cst_84 = arith.constant 1.000000e+00 : f32
    %303 = vector.broadcast %cst_84 : f32 to vector<2x1xf32>
    %304 = arith.subf %302, %303 : vector<2x1xf32>
    %c0_85 = arith.constant 0 : index
    %c0_86 = arith.constant 0 : index
    %305 = vector.load %arg15[%c0_85, %c0_86] : memref<2x32xf32, #tpu.memory_space<vmem>>, vector<2x32xf32>
    %c0_87 = arith.constant 0 : index
    %c0_88 = arith.constant 0 : index
    %306 = vector.load %arg16[%c0_87, %c0_88] : memref<2x16xf32, #tpu.memory_space<vmem>>, vector<2x16xf32>
    %c0_89 = arith.constant 0 : index
    %c0_90 = arith.constant 0 : index
    %307 = vector.load %arg17[%c0_89, %c0_90] : memref<1x4xf32, #tpu.memory_space<vmem>>, vector<1x4xf32>
    %308 = vector.extract_strided_slice %305 {offsets = [0, 0], sizes = [1, 32], strides = [1, 1]} : vector<2x32xf32> to vector<1x32xf32>
    %309 = vector.broadcast %308 : vector<1x32xf32> to vector<2x32xf32>
    %310 = arith.mulf %126, %309 : vector<2x32xf32>
    %cst_91 = arith.constant dense<0.000000e+00> : vector<2xf32>
    %311 = vector.multi_reduction <add>, %310, %cst_91 [1] : vector<2x32xf32> to vector<2xf32>
    %312 = vector.shape_cast %311 : vector<2xf32> to vector<2x1xf32>
    %313 = vector.extract_strided_slice %307 {offsets = [0, 0], sizes = [1, 1], strides = [1, 1]} : vector<1x4xf32> to vector<1x1xf32>
    %314 = vector.extract %313[0, 0] : f32 from vector<1x1xf32>
    %315 = vector.broadcast %314 : f32 to vector<2x1xf32>
    %316 = arith.addf %312, %315 : vector<2x1xf32>
    %317 = vector.extract_strided_slice %305 {offsets = [1, 0], sizes = [1, 32], strides = [1, 1]} : vector<2x32xf32> to vector<1x32xf32>
    %318 = vector.broadcast %317 : vector<1x32xf32> to vector<2x32xf32>
    %319 = arith.mulf %169, %318 : vector<2x32xf32>
    %cst_92 = arith.constant dense<0.000000e+00> : vector<2xf32>
    %320 = vector.multi_reduction <add>, %319, %cst_92 [1] : vector<2x32xf32> to vector<2xf32>
    %321 = vector.shape_cast %320 : vector<2xf32> to vector<2x1xf32>
    %322 = vector.extract_strided_slice %307 {offsets = [0, 1], sizes = [1, 1], strides = [1, 1]} : vector<1x4xf32> to vector<1x1xf32>
    %323 = vector.extract %322[0, 0] : f32 from vector<1x1xf32>
    %324 = vector.broadcast %323 : f32 to vector<2x1xf32>
    %325 = arith.addf %321, %324 : vector<2x1xf32>
    %326 = vector.extract_strided_slice %306 {offsets = [0, 0], sizes = [1, 16], strides = [1, 1]} : vector<2x16xf32> to vector<1x16xf32>
    %327 = vector.broadcast %326 : vector<1x16xf32> to vector<2x16xf32>
    %328 = arith.mulf %212, %327 : vector<2x16xf32>
    %cst_93 = arith.constant dense<0.000000e+00> : vector<2xf32>
    %329 = vector.multi_reduction <add>, %328, %cst_93 [1] : vector<2x16xf32> to vector<2xf32>
    %330 = vector.shape_cast %329 : vector<2xf32> to vector<2x1xf32>
    %331 = vector.extract_strided_slice %307 {offsets = [0, 2], sizes = [1, 1], strides = [1, 1]} : vector<1x4xf32> to vector<1x1xf32>
    %332 = vector.extract %331[0, 0] : f32 from vector<1x1xf32>
    %333 = vector.broadcast %332 : f32 to vector<2x1xf32>
    %334 = arith.addf %330, %333 : vector<2x1xf32>
    %335 = vector.extract_strided_slice %306 {offsets = [1, 0], sizes = [1, 16], strides = [1, 1]} : vector<2x16xf32> to vector<1x16xf32>
    %336 = vector.broadcast %335 : vector<1x16xf32> to vector<2x16xf32>
    %337 = arith.mulf %255, %336 : vector<2x16xf32>
    %cst_94 = arith.constant dense<0.000000e+00> : vector<2xf32>
    %338 = vector.multi_reduction <add>, %337, %cst_94 [1] : vector<2x16xf32> to vector<2xf32>
    %339 = vector.shape_cast %338 : vector<2xf32> to vector<2x1xf32>
    %340 = vector.extract_strided_slice %307 {offsets = [0, 3], sizes = [1, 1], strides = [1, 1]} : vector<1x4xf32> to vector<1x1xf32>
    %341 = vector.extract %340[0, 0] : f32 from vector<1x1xf32>
    %342 = vector.broadcast %341 : f32 to vector<2x1xf32>
    %343 = arith.addf %339, %342 : vector<2x1xf32>
    %344 = arith.maximumf %316, %325 : vector<2x1xf32>
    %345 = arith.maximumf %334, %343 : vector<2x1xf32>
    %346 = arith.maximumf %344, %345 : vector<2x1xf32>
    %347 = arith.subf %316, %346 : vector<2x1xf32>
    %348 = math.exp %347 : vector<2x1xf32>
    %349 = arith.subf %325, %346 : vector<2x1xf32>
    %350 = math.exp %349 : vector<2x1xf32>
    %351 = arith.subf %334, %346 : vector<2x1xf32>
    %352 = math.exp %351 : vector<2x1xf32>
    %353 = arith.subf %343, %346 : vector<2x1xf32>
    %354 = math.exp %353 : vector<2x1xf32>
    %355 = arith.addf %348, %350 : vector<2x1xf32>
    %356 = arith.addf %355, %352 : vector<2x1xf32>
    %357 = arith.addf %356, %354 : vector<2x1xf32>
    %cst_95 = arith.constant 1.000000e+00 : f32
    %358 = vector.broadcast %cst_95 : f32 to vector<2x1xf32>
    %359 = arith.divf %358, %357 : vector<2x1xf32>
    %360 = vector.broadcast %348 : vector<2x1xf32> to vector<2x32xf32>
    %361 = arith.mulf %360, %126 : vector<2x32xf32>
    %362 = arith.mulf %350, %304 : vector<2x1xf32>
    %363 = vector.broadcast %362 : vector<2x1xf32> to vector<2x32xf32>
    %364 = arith.mulf %363, %169 : vector<2x32xf32>
    %365 = arith.addf %361, %364 : vector<2x32xf32>
    %366 = vector.broadcast %359 : vector<2x1xf32> to vector<2x32xf32>
    %367 = arith.mulf %365, %366 : vector<2x32xf32>
    %368 = vector.broadcast %352 : vector<2x1xf32> to vector<2x16xf32>
    %369 = arith.mulf %368, %212 : vector<2x16xf32>
    %370 = arith.mulf %354, %304 : vector<2x1xf32>
    %371 = vector.broadcast %370 : vector<2x1xf32> to vector<2x16xf32>
    %372 = arith.mulf %371, %255 : vector<2x16xf32>
    %373 = arith.addf %369, %372 : vector<2x16xf32>
    %374 = vector.broadcast %359 : vector<2x1xf32> to vector<2x16xf32>
    %375 = arith.mulf %373, %374 : vector<2x16xf32>
    %cst_96 = arith.constant 0.000000e+00 : f32
    %376 = vector.broadcast %cst_96 : f32 to vector<2x128xf32>
    %c0_97 = arith.constant 0 : index
    %c0_98 = arith.constant 0 : index
    %377 = vector.load %arg21[%c0_97, %c0_98] : memref<2x128xf32, #tpu.memory_space<vmem>>, vector<2x128xf32>
    tpu.vector_store %arg21[%c0_97, %c0_98], %376 {strides = array<i32>} : memref<2x128xf32, #tpu.memory_space<vmem>>, vector<2x128xf32>,
    %378 = vector.extract_strided_slice %33 {offsets = [0, 0], sizes = [4, 32], strides = [1, 1]} : vector<8x32xf32> to vector<4x32xf32>
    %379 = vector.extract_strided_slice %83 {offsets = [0, 0], sizes = [4, 16], strides = [1, 1]} : vector<8x16xf32> to vector<4x16xf32>
    %380 = vector.extract_strided_slice %367 {offsets = [0, 0], sizes = [1, 32], strides = [1, 1]} : vector<2x32xf32> to vector<1x32xf32>
    %381 = vector.broadcast %380 : vector<1x32xf32> to vector<4x32xf32>
    %382 = arith.mulf %378, %381 : vector<4x32xf32>
    %cst_99 = arith.constant dense<0.000000e+00> : vector<4xf32>
    %383 = vector.multi_reduction <add>, %382, %cst_99 [1] : vector<4x32xf32> to vector<4xf32>
    %384 = vector.extract_strided_slice %375 {offsets = [0, 0], sizes = [1, 16], strides = [1, 1]} : vector<2x16xf32> to vector<1x16xf32>
    %385 = vector.broadcast %384 : vector<1x16xf32> to vector<4x16xf32>
    %386 = arith.mulf %379, %385 : vector<4x16xf32>
    %cst_100 = arith.constant dense<0.000000e+00> : vector<4xf32>
    %387 = vector.multi_reduction <add>, %386, %cst_100 [1] : vector<4x16xf32> to vector<4xf32>
    %388 = arith.addf %383, %387 : vector<4xf32>
    %c0_101 = arith.constant 0 : index
    %c0_102 = arith.constant 0 : index
    %389 = vector.load %arg21[%c0_101, %c0_102] : memref<2x128xf32, #tpu.memory_space<vmem>>, vector<1x4xf32>
    %390 = vector.shape_cast %389 : vector<1x4xf32> to vector<4xf32>
    %391 = vector.shape_cast %388 : vector<4xf32> to vector<1x4xf32>
    tpu.vector_store %arg21[%c0_101, %c0_102], %391 {strides = array<i32>} : memref<2x128xf32, #tpu.memory_space<vmem>>, vector<1x4xf32>,
    %392 = vector.extract_strided_slice %33 {offsets = [4, 0], sizes = [4, 32], strides = [1, 1]} : vector<8x32xf32> to vector<4x32xf32>
    %393 = vector.extract_strided_slice %83 {offsets = [4, 0], sizes = [4, 16], strides = [1, 1]} : vector<8x16xf32> to vector<4x16xf32>
    %394 = vector.extract_strided_slice %367 {offsets = [1, 0], sizes = [1, 32], strides = [1, 1]} : vector<2x32xf32> to vector<1x32xf32>
    %395 = vector.broadcast %394 : vector<1x32xf32> to vector<4x32xf32>
    %396 = arith.mulf %392, %395 : vector<4x32xf32>
    %cst_103 = arith.constant dense<0.000000e+00> : vector<4xf32>
    %397 = vector.multi_reduction <add>, %396, %cst_103 [1] : vector<4x32xf32> to vector<4xf32>
    %398 = vector.extract_strided_slice %375 {offsets = [1, 0], sizes = [1, 16], strides = [1, 1]} : vector<2x16xf32> to vector<1x16xf32>
    %399 = vector.broadcast %398 : vector<1x16xf32> to vector<4x16xf32>
    %400 = arith.mulf %393, %399 : vector<4x16xf32>
    %cst_104 = arith.constant dense<0.000000e+00> : vector<4xf32>
    %401 = vector.multi_reduction <add>, %400, %cst_104 [1] : vector<4x16xf32> to vector<4xf32>
    %402 = arith.addf %397, %401 : vector<4xf32>
    %c1 = arith.constant 1 : index
    %c0_105 = arith.constant 0 : index
    %403 = vector.load %arg21[%c1, %c0_105] : memref<2x128xf32, #tpu.memory_space<vmem>>, vector<1x4xf32>
    %404 = vector.shape_cast %403 : vector<1x4xf32> to vector<4xf32>
    %405 = vector.shape_cast %402 : vector<4xf32> to vector<1x4xf32>
    tpu.vector_store %arg21[%c1, %c0_105], %405 {strides = array<i32>} : memref<2x128xf32, #tpu.memory_space<vmem>>, vector<1x4xf32>,
    %c0_106 = arith.constant 0 : index
    %c4 = arith.constant 4 : index
    %406 = vector.load %arg21[%c0_106, %c4] : memref<2x128xf32, #tpu.memory_space<vmem>>, vector<2x1xf32>
    tpu.vector_store %arg21[%c0_106, %c4], %279 {strides = array<i32>} : memref<2x128xf32, #tpu.memory_space<vmem>>, vector<2x1xf32>,
    return
  }
}

</mosaic_0001>

<llo_original>
// kernel: squeeze.1
$region0: #{squeeze.1}
  %s0 = inlined_call_operand.vmem [shape: f32[2,8], index: 0, kind: input, shape index: {}]
  %s1 = inlined_call_operand.vmem [shape: f32[16,1], index: 1, kind: output, shape index: {}]
  $region1: #{squeeze.1} parent=0
    #allocation0 [shape = 'u8[4096]{0}', space=vmem, size = 0x1000, scoped, tag = 'scoped mem for input reshape']
    %s3 = ssub.s32 4, 1
    %v4 = vld [vmem:[%s0] sm:%s3]
    %5 = vst [vmem:[#allocation0] sm:%s3] %v4
    %v6 = vld [vmem:[#allocation0] sm:$0x3]
    %vm7 = vcmask 7168
    %8 = vst.msk [vmem:[%s1] ss:$8 sm:$0x3] %vm7, %v6
    %v9 = vld [vmem:[#allocation0] sm:$0x3]
    %10 = vrot.lane.b32.xlu0 %v9, 127
    %v11 = vpop.permute.xlu0 %10
    %vm12 = vcmask 7168
    %s13 = scalar_lea.vmem %s1, 1
    %14 = vst.msk [vmem:[%s13] ss:$8 sm:$0x3] %vm12, %v11
    %v15 = vld [vmem:[#allocation0] sm:$0x3]
    %16 = vrot.lane.b32.xlu0 %v15, 126
    %v17 = vpop.permute.xlu0 %16
    %vm18 = vcmask 7168
    %s19 = scalar_lea.vmem %s1, 2
    %20 = vst.msk [vmem:[%s19] ss:$8 sm:$0x3] %vm18, %v17
    %v21 = vld [vmem:[#allocation0] sm:$0x3]
    %22 = vrot.lane.b32.xlu0 %v21, 125
    %v23 = vpop.permute.xlu0 %22
    %vm24 = vcmask 7168
    %s25 = scalar_lea.vmem %s1, 3
    %26 = vst.msk [vmem:[%s25] ss:$8 sm:$0x3] %vm24, %v23
    %v27 = vld [vmem:[#allocation0] sm:$0x3]
    %28 = vrot.lane.b32.xlu0 %v27, 124
    %v29 = vpop.permute.xlu0 %28
    %vm30 = vcmask 7168
    %s31 = scalar_lea.vmem %s1, 4
    %32 = vst.msk [vmem:[%s31] ss:$8 sm:$0x3] %vm30, %v29
    %v33 = vld [vmem:[#allocation0] sm:$0x3]
    %34 = vrot.lane.b32.xlu0 %v33, 123
    %v35 = vpop.permute.xlu0 %34
    %vm36 = vcmask 7168
    %s37 = scalar_lea.vmem %s1, 5
    %38 = vst.msk [vmem:[%s37] ss:$8 sm:$0x3] %vm36, %v35
    %v39 = vld [vmem:[#allocation0] sm:$0x3]
    %40 = vrot.lane.b32.xlu0 %v39, 122
    %v41 = vpop.permute.xlu0 %40
    %vm42 = vcmask 7168
    %s43 = scalar_lea.vmem %s1, 6
    %44 = vst.msk [vmem:[%s43] ss:$8 sm:$0x3] %vm42, %v41
    %v45 = vld [vmem:[#allocation0] sm:$0x3]
    %46 = vrot.lane.b32.xlu0 %v45, 121
    %v47 = vpop.permute.xlu0 %46
    %vm48 = vcmask 7168
    %s49 = scalar_lea.vmem %s1, 7
    %50 = vst.msk [vmem:[%s49] ss:$8 sm:$0x3] %vm48, %v47

// kernel: hpdm_forward.1
$region0: #{hpdm_forward.1}
  #allocation0 [shape = 'u32[]', space=smem, size = 0x4, offset = 0x4, fixed_abs, tag = 'smem constant byte address 0x4 - core index']
  #allocation1 [shape = 'u32[72,128]{1,0:T(1,128)}', space=vmem, size = 0x9000, scoped, tag = 'internal scratch']
  %s0 = inlined_call_operand.vmem [shape: f32[24,32], index: 0, kind: input, shape index: {}]
  %s1 = inlined_call_operand.vmem [shape: s32[16,1], index: 1, kind: input, shape index: {}]
  %s2 = inlined_call_operand.vmem [shape: s32[16,1], index: 2, kind: input, shape index: {}]
  %s3 = inlined_call_operand.vmem [shape: s32[8,1], index: 3, kind: input, shape index: {}]
  %s4 = inlined_call_operand.vmem [shape: s32[8,1], index: 4, kind: input, shape index: {}]
  %s5 = inlined_call_operand.vmem [shape: f32[16,1], index: 5, kind: input, shape index: {}]
  %s6 = inlined_call_operand.vmem [shape: f32[16,1], index: 6, kind: input, shape index: {}]
  %s7 = inlined_call_operand.hbm [shape: f32[32,32], index: 7, kind: input, shape index: {}]
  %s8 = inlined_call_operand.vmem [shape: f32[1,32], index: 8, kind: input, shape index: {}]
  %s9 = inlined_call_operand.hbm [shape: f32[16,16], index: 9, kind: input, shape index: {}]
  %s10 = inlined_call_operand.hbm [shape: f32[32,16], index: 10, kind: input, shape index: {}]
  %s11 = inlined_call_operand.vmem [shape: f32[48,16], index: 11, kind: input, shape index: {}]
  %s12 = inlined_call_operand.vmem [shape: f32[48,16], index: 12, kind: input, shape index: {}]
  %s13 = inlined_call_operand.hbm [shape: f32[32,16], index: 13, kind: input, shape index: {}]
  %s14 = inlined_call_operand.hbm [shape: f32[32,16], index: 14, kind: input, shape index: {}]
  %s15 = inlined_call_operand.vmem [shape: f32[2,32], index: 15, kind: input, shape index: {}]
  %s16 = inlined_call_operand.vmem [shape: f32[2,16], index: 16, kind: input, shape index: {}]
  %s17 = inlined_call_operand.vmem [shape: f32[1,4], index: 17, kind: input, shape index: {}]
  %s18 = inlined_call_operand.vmem [shape: f32[1,32], index: 18, kind: input, shape index: {}]
  %s19 = inlined_call_operand.vmem [shape: f32[1,16], index: 19, kind: input, shape index: {}]
  %s20 = inlined_call_operand.vmem [shape: f32[1,2], index: 20, kind: input, shape index: {}]
  %s21 = inlined_call_operand.vmem [shape: f32[2,128], index: 21, kind: output, shape index: {}]
  %s22 = sld [smem:[#allocation0]]
  $region114: #{hpdm_forward.1} parent=0
    _
  %s24 = ssub.s32 1, %s22
  %s25 = scalar_select 0, %s24, %s22
  $region1: #{hpdm_forward.1} parent=0
    #allocation2 [shape = 'u8[16384]{0}', space=vmem, size = 0x4000, scoped, tag = 'input window, operand 7, single buffered']
    #allocation3 [shape = 's32[1]{0}', space=sflag, size = 0x4, scoped, tag = 'scoped memory for hpdm_forward.1']
    #allocation4 [shape = 'u8[8192]{0}', space=vmem, size = 0x2000, scoped, tag = 'input window, operand 9, single buffered']
    #allocation5 [shape = 's32[1]{0}', space=sflag, size = 0x4, scoped, tag = 'scoped memory for hpdm_forward.1']
    #allocation6 [shape = 'u8[16384]{0}', space=vmem, size = 0x4000, scoped, tag = 'input window, operand 10, single buffered']
    #allocation7 [shape = 'u8[16384]{0}', space=vmem, size = 0x4000, scoped, tag = 'input window, operand 13, single buffered']
    #allocation8 [shape = 's32[1]{0}', space=sflag, size = 0x4, scoped, tag = 'scoped memory for hpdm_forward.1']
    #allocation9 [shape = 'u8[16384]{0}', space=vmem, size = 0x4000, scoped, tag = 'input window, operand 14, single buffered']
    %26 = vsyncpa [#allocation3], 0
    %27 = vsyncpa [#allocation5], 0
    %28 = vsyncpa [#allocation8], 0
    // Predicated region
    $region2: #{hpdm_forward.1} parent=1 // pred_check
      _
    $region3: #{hpdm_forward.1} parent=1 // pred_check_branch
      %30 = sbr.rel (0) target = $region5
    $region4: #{hpdm_forward.1} parent=1 // pred_region
      _
    $region5: #{hpdm_forward.1} parent=1 // pred_fallthru
      _
    // Predicated region
    $region6: #{hpdm_forward.1} parent=1 // pred_check
      _
    $region7: #{hpdm_forward.1} parent=1 // pred_check_branch
      %32 = sbr.rel (0) target = $region9
    $region8: #{hpdm_forward.1} parent=1 // pred_region
      _
    $region9: #{hpdm_forward.1} parent=1 // pred_fallthru
      _
    // Predicated region
    $region10: #{hpdm_forward.1} parent=1 // pred_check
      _
    $region11: #{hpdm_forward.1} parent=1 // pred_check_branch
      %34 = sbr.rel (0) target = $region13
    $region12: #{hpdm_forward.1} parent=1 // pred_region
      _
    $region13: #{hpdm_forward.1} parent=1 // pred_fallthru
      _
    // Predicated region
    $region14: #{hpdm_forward.1} parent=1 // pred_check
      _
    $region15: #{hpdm_forward.1} parent=1 // pred_check_branch
      %36 = sbr.rel (0) target = $region17
    $region16: #{hpdm_forward.1} parent=1 // pred_region
      _
    $region17: #{hpdm_forward.1} parent=1 // pred_fallthru
      _
    // Predicated region
    $region18: #{hpdm_forward.1} parent=1 // pred_check
      _
    $region19: #{hpdm_forward.1} parent=1 // pred_check_branch
      %38 = sbr.rel (0) target = $region21
    $region20: #{hpdm_forward.1} parent=1 // pred_region
      _
    $region21: #{hpdm_forward.1} parent=1 // pred_fallthru
      _
    // Predicated region
    $region22: #{hpdm_forward.1} parent=1 // pred_check
      _
    $region23: #{hpdm_forward.1} parent=1 // pred_check_branch
      %40 = sbr.rel (0) target = $region25
    $region24: #{hpdm_forward.1} parent=1 // pred_region
      _
    $region25: #{hpdm_forward.1} parent=1 // pred_fallthru
      _
    // Predicated region
    $region26: #{hpdm_forward.1} parent=1 // pred_check
      _
    $region27: #{hpdm_forward.1} parent=1 // pred_check_branch
      %42 = sbr.rel (0) target = $region29
    $region28: #{hpdm_forward.1} parent=1 // pred_region
      _
    $region29: #{hpdm_forward.1} parent=1 // pred_fallthru
      _
    // Predicated region
    $region30: #{hpdm_forward.1} parent=1 // pred_check
      _
    $region31: #{hpdm_forward.1} parent=1 // pred_check_branch
      %44 = sbr.rel (0) target = $region33
    $region32: #{hpdm_forward.1} parent=1 // pred_region
      %46 = vsyncadd [#allocation3], 0
      %s47 = sshll.u32 %s7, 4
      %s48 = int_to_ptr.hbm [resolvable:$true] %s47
      %s49 = sshll.u32 [#allocation2], 4
      %s50 = int_to_ptr.vmem [resolvable:$true] %s49
      %55 = dma.hbm_to_vmem [thread:$0]  %s48, 512, %s50, [#allocation3], 128, 128, 8
    $region33: #{hpdm_forward.1} parent=1 // pred_fallthru
      _
    // Predicated region
    $region34: #{hpdm_forward.1} parent=1 // pred_check
      _
    $region35: #{hpdm_forward.1} parent=1 // pred_check_branch
      %57 = sbr.rel (0) target = $region37
    $region36: #{hpdm_forward.1} parent=1 // pred_region
      _
    $region37: #{hpdm_forward.1} parent=1 // pred_fallthru
      _
    // Predicated region
    $region38: #{hpdm_forward.1} parent=1 // pred_check
      _
    $region39: #{hpdm_forward.1} parent=1 // pred_check_branch
      %59 = sbr.rel (0) target = $region41
    $region40: #{hpdm_forward.1} parent=1 // pred_region
      %61 = vsyncadd [#allocation5], 0
      %s62 = sshll.u32 %s9, 4
      %s63 = int_to_ptr.hbm [resolvable:$true] %s62
      %s64 = sshll.u32 [#allocation4], 4
      %s65 = int_to_ptr.vmem [resolvable:$true] %s64
      %70 = dma.hbm_to_vmem [thread:$0]  %s63, 256, %s65, [#allocation5], 128, 128, 8
    $region41: #{hpdm_forward.1} parent=1 // pred_fallthru
      _
    // Predicated region
    $region42: #{hpdm_forward.1} parent=1 // pred_check
      _
    $region43: #{hpdm_forward.1} parent=1 // pred_check_branch
      %72 = sbr.rel (0) target = $region45
    $region44: #{hpdm_forward.1} parent=1 // pred_region
      %74 = vsyncadd [#allocation5], 0
      %s75 = sshll.u32 %s10, 4
      %s76 = int_to_ptr.hbm [resolvable:$true] %s75
      %s77 = sshll.u32 [#allocation6], 4
      %s78 = int_to_ptr.vmem [resolvable:$true] %s77
      %83 = dma.hbm_to_vmem [thread:$0]  %s76, 512, %s78, [#allocation5], 128, 128, 8
    $region45: #{hpdm_forward.1} parent=1 // pred_fallthru
      _
    // Predicated region
    $region46: #{hpdm_forward.1} parent=1 // pred_check
      _
    $region47: #{hpdm_forward.1} parent=1 // pred_check_branch
      %85 = sbr.rel (0) target = $region49
    $region48: #{hpdm_forward.1} parent=1 // pred_region
      _
    $region49: #{hpdm_forward.1} parent=1 // pred_fallthru
      _
    // Predicated region
    $region50: #{hpdm_forward.1} parent=1 // pred_check
      _
    $region51: #{hpdm_forward.1} parent=1 // pred_check_branch
      %87 = sbr.rel (0) target = $region53
    $region52: #{hpdm_forward.1} parent=1 // pred_region
      _
    $region53: #{hpdm_forward.1} parent=1 // pred_fallthru
      _
    // Predicated region
    $region54: #{hpdm_forward.1} parent=1 // pred_check
      _
    $region55: #{hpdm_forward.1} parent=1 // pred_check_branch
      %89 = sbr.rel (0) target = $region57
    $region56: #{hpdm_forward.1} parent=1 // pred_region
      %91 = vsyncadd [#allocation8], 0
      %s92 = sshll.u32 %s13, 4
      %s93 = int_to_ptr.hbm [resolvable:$true] %s92
      %s94 = sshll.u32 [#allocation7], 4
      %s95 = int_to_ptr.vmem [resolvable:$true] %s94
      %100 = dma.hbm_to_vmem [thread:$0]  %s93, 512, %s95, [#allocation8], 128, 128, 8
    $region57: #{hpdm_forward.1} parent=1 // pred_fallthru
      _
    // Predicated region
    $region58: #{hpdm_forward.1} parent=1 // pred_check
      _
    $region59: #{hpdm_forward.1} parent=1 // pred_check_branch
      %102 = sbr.rel (0) target = $region61
    $region60: #{hpdm_forward.1} parent=1 // pred_region
      %104 = vsyncadd [#allocation8], 0
      %s105 = sshll.u32 %s14, 4
      %s106 = int_to_ptr.hbm [resolvable:$true] %s105
      %s107 = sshll.u32 [#allocation9], 4
      %s108 = int_to_ptr.vmem [resolvable:$true] %s107
      %113 = dma.hbm_to_vmem [thread:$0]  %s106, 512, %s108, [#allocation8], 128, 128, 8
    $region61: #{hpdm_forward.1} parent=1 // pred_fallthru
      _
    // Predicated region
    $region62: #{hpdm_forward.1} parent=1 // pred_check
      _
    $region63: #{hpdm_forward.1} parent=1 // pred_check_branch
      %115 = sbr.rel (0) target = $region65
    $region64: #{hpdm_forward.1} parent=1 // pred_region
      _
    $region65: #{hpdm_forward.1} parent=1 // pred_fallthru
      _
    // Predicated region
    $region66: #{hpdm_forward.1} parent=1 // pred_check
      _
    $region67: #{hpdm_forward.1} parent=1 // pred_check_branch
      %117 = sbr.rel (0) target = $region69
    $region68: #{hpdm_forward.1} parent=1 // pred_region
      _
    $region69: #{hpdm_forward.1} parent=1 // pred_fallthru
      _
    // Predicated region
    $region70: #{hpdm_forward.1} parent=1 // pred_check
      _
    $region71: #{hpdm_forward.1} parent=1 // pred_check_branch
      %119 = sbr.rel (0) target = $region73
    $region72: #{hpdm_forward.1} parent=1 // pred_region
      _
    $region73: #{hpdm_forward.1} parent=1 // pred_fallthru
      _
    // Predicated region
    $region74: #{hpdm_forward.1} parent=1 // pred_check
      _
    $region75: #{hpdm_forward.1} parent=1 // pred_check_branch
      %121 = sbr.rel (0) target = $region77
    $region76: #{hpdm_forward.1} parent=1 // pred_region
      _
    $region77: #{hpdm_forward.1} parent=1 // pred_fallthru
      _
    // Predicated region
    $region78: #{hpdm_forward.1} parent=1 // pred_check
      _
    $region79: #{hpdm_forward.1} parent=1 // pred_check_branch
      %123 = sbr.rel (0) target = $region81
    $region80: #{hpdm_forward.1} parent=1 // pred_region
      _
    $region81: #{hpdm_forward.1} parent=1 // pred_fallthru
      _
    // Predicated region
    $region82: #{hpdm_forward.1} parent=1 // pred_check
      _
    $region83: #{hpdm_forward.1} parent=1 // pred_check_branch
      %125 = sbr.rel (0) target = $region85
    $region84: #{hpdm_forward.1} parent=1 // pred_region
      _
    $region85: #{hpdm_forward.1} parent=1 // pred_fallthru
      _
    // Predicated region
    $region86: #{hpdm_forward.1} parent=1 // pred_check
      _
    $region87: #{hpdm_forward.1} parent=1 // pred_check_branch
      %127 = sbr.rel (0) target = $region89
    $region88: #{hpdm_forward.1} parent=1 // pred_region
      %129 = dma.done [#allocation3], 512
    $region89: #{hpdm_forward.1} parent=1 // pred_fallthru
      _
    // Predicated region
    $region90: #{hpdm_forward.1} parent=1 // pred_check
      _
    $region91: #{hpdm_forward.1} parent=1 // pred_check_branch
      %131 = sbr.rel (0) target = $region93
    $region92: #{hpdm_forward.1} parent=1 // pred_region
      %133 = dma.done [#allocation5], 256
    $region93: #{hpdm_forward.1} parent=1 // pred_fallthru
      _
    // Predicated region
    $region94: #{hpdm_forward.1} parent=1 // pred_check
      _
    $region95: #{hpdm_forward.1} parent=1 // pred_check_branch
      %135 = sbr.rel (0) target = $region97
    $region96: #{hpdm_forward.1} parent=1 // pred_region
      %137 = dma.done [#allocation5], 512
    $region97: #{hpdm_forward.1} parent=1 // pred_fallthru
      _
    // Predicated region
    $region98: #{hpdm_forward.1} parent=1 // pred_check
      _
    $region99: #{hpdm_forward.1} parent=1 // pred_check_branch
      %139 = sbr.rel (0) target = $region101
    $region100: #{hpdm_forward.1} parent=1 // pred_region
      %141 = dma.done [#allocation8], 512
    $region101: #{hpdm_forward.1} parent=1 // pred_fallthru
      _
    // Predicated region
    $region102: #{hpdm_forward.1} parent=1 // pred_check
      _
    $region103: #{hpdm_forward.1} parent=1 // pred_check_branch
      %143 = sbr.rel (0) target = $region105
    $region104: #{hpdm_forward.1} parent=1 // pred_region
      %145 = dma.done [#allocation8], 512
    $region105: #{hpdm_forward.1} parent=1 // pred_fallthru
      _
    %v146 = vld [vmem:[%s1] sm:$0xff]
    %v147 = vld [vmem:[%s1 + $0x8] sm:$0xff]
    %v148 = vld [vmem:[%s2] sm:$0xff]
    %v149 = vld [vmem:[%s2 + $0x8] sm:$0xff]
    %vm150 = vcmp.eq.s32.totalorder %v146, 1
    %vm151 = vcmp.eq.s32.totalorder %v147, 1
    %vm152 = vcmp.eq.s32.totalorder %v146, 2
    %vm153 = vcmp.eq.s32.totalorder %v147, 2
    %vm154 = vmor %vm150, %vm152
    %vm155 = vmor %vm151, %vm153
    %vm156 = vcmp.eq.s32.totalorder %v146, 4
    %vm157 = vcmp.eq.s32.totalorder %v147, 4
    %vm158 = vmor %vm154, %vm156
    %vm159 = vmor %vm155, %vm157
    %v160 = vsel %vm158, 1, 0
    %v161 = vsel %vm159, 1, 0
    %v162 = vsub.s32 1, %v160
    %v163 = vsub.s32 1, %v161
    %v164 = vcvt.s32.f32 %v160
    %v165 = vcvt.s32.f32 %v161
    %v166 = vcvt.s32.f32 %v162
    %v167 = vcvt.s32.f32 %v163
    %v168 = vld [vmem:[%s8] sm:$0x1]
    %v169 = vld [vmem:[%s0] sm:$0xff]
    %v170 = vld [vmem:[%s0 + $0x8] sm:$0xff]
    %v171 = vld [vmem:[%s0 + $0x10] sm:$0xff]
    %v172 = vld [vmem:[#allocation2] sm:$0xff]
    %v173 = vld [vmem:[#allocation2 + $0x8] sm:$0xff]
    %v174 = vld [vmem:[#allocation2 + $0x10] sm:$0xff]
    %v175 = vld [vmem:[#allocation2 + $0x18] sm:$0xff]
    %vm176 = vcmask 261120
    %v178 = vsel %vm176, %v169, 0
    %v181 = vsel %vm176, %v170, 0
    %v184 = vsel %vm176, %v171, 0
    %186 = vmatpush.msra.mxu0 0.0
    %187 = vmatpush.msra.mxu0 0.0
    %188 = vmatpush.msra.mxu0 0.0
    %189 = vmatpush.msra.mxu0 0.0
    %190 = vmatpush.msra.mxu0 0.0
    %191 = vmatpush.msra.mxu0 0.0
    %192 = vmatpush.msra.mxu0 0.0
    %193 = vmatpush.msra.mxu0 0.0
    %194 = vmatpush.msra.mxu0 0.0
    %195 = vmatpush.msra.mxu0 0.0
    %196 = vmatpush.msra.mxu0 0.0
    %197 = vmatpush.msra.mxu0 0.0
    %198 = vmatpush.msra.mxu0 %v175
    %199 = vmatpush.msra.mxu0 %v174
    %200 = vmatpush.msra.mxu0 %v173
    %201 = vmatpush.msra.mxu0 %v172
    %202 = vmatmul.f32.gmra.mxu0 %v178
    %v203 = vpop.f32.mrf.mxu0
    %v204 = vadd.f32 0.0, %v203
    %205 = vmatmul.f32.gmra.mxu0 %v181
    %v206 = vpop.f32.mrf.mxu0
    %v207 = vadd.f32 0.0, %v206
    %208 = vmatmul.f32.gmra.mxu0 %v184
    %v209 = vpop.f32.mrf.mxu0
    %v210 = vadd.f32 0.0, %v209
    %211 = vdwg.mxu0
    %213 = vset.pattern.permute.xlu0 0
    %214 = vperm.xlu0 %213, %v164
    %v215 = vpop.permute.xlu0 %214
    %218 = vset.pattern.permute.xlu0 0
    %219 = vperm.xlu0 %218, %v165
    %v220 = vpop.permute.xlu0 %219
    %v222 = vmul.f32 %v215, %v204
    %v223 = vmul.f32 %v220, %v207
    %v225 = vperm.slane %v168, 0
    %v227 = vadd.f32 %v222, %v225
    %v228 = vadd.f32 %v223, %v225
    %v229 = vtanh.pop %v227
    %v230 = vtanh.pop %v228
    %232 = vset.pattern.permute.xlu0 0
    %233 = vperm.xlu0 %232, %v166
    %v234 = vpop.permute.xlu0 %233
    %237 = vset.pattern.permute.xlu0 0
    %238 = vperm.xlu0 %237, %v167
    %v239 = vpop.permute.xlu0 %238
    %v241 = vmul.f32 %v234, %v204
    %v242 = vmul.f32 %v239, %v207
    %v243 = vadd.f32 %v241, %v225
    %v244 = vadd.f32 %v242, %v225
    %v245 = vtanh.pop %v243
    %v246 = vtanh.pop %v244
    %v247 = vadd.f32 %v210, %v225
    %v248 = vtanh.pop %v247
    %v249 = vld [vmem:[#allocation4] sm:$0xff]
    %v250 = vld [vmem:[#allocation4 + $0x8] sm:$0xff]
    %v251 = vld [vmem:[#allocation6] sm:$0xff]
    %v252 = vld [vmem:[#allocation6 + $0x8] sm:$0xff]
    %v253 = vld [vmem:[#allocation6 + $0x10] sm:$0xff]
    %v254 = vld [vmem:[#allocation6 + $0x18] sm:$0xff]
    %v255 = vmul.u32 %v146, %v160
    %v256 = vmul.u32 %v147, %v161
    %v257 = vlaneseq
    %v258 = vand.u32 %v257, 127
    %259 = vset.pattern.permute.xlu0 0
    %260 = vperm.xlu0 %259, %v255
    %v261 = vpop.permute.xlu0 %260
    %262 = vset.pattern.permute.xlu0 0
    %263 = vperm.xlu0 %262, %v256
    %v264 = vpop.permute.xlu0 %263
    %vm265 = vcmp.eq.s32.totalorder %v261, %v258
    %vm266 = vcmp.eq.s32.totalorder %v264, %v258
    %v267 = vsel %vm265, 1, 0
    %v268 = vsel %vm266, 1, 0
    %v269 = vcvt.s32.f32 %v267
    %v270 = vcvt.s32.f32 %v268
    %v271 = vmul.u32 %v148, %v160
    %v272 = vmul.u32 %v149, %v161
    %273 = vset.pattern.permute.xlu0 0
    %274 = vperm.xlu0 %273, %v271
    %v275 = vpop.permute.xlu0 %274
    %276 = vset.pattern.permute.xlu0 0
    %277 = vperm.xlu0 %276, %v272
    %v278 = vpop.permute.xlu0 %277
    %vm279 = vcmp.eq.s32.totalorder %v275, %v258
    %vm280 = vcmp.eq.s32.totalorder %v278, %v258
    %v281 = vsel %vm279, 1, 0
    %v282 = vsel %vm280, 1, 0
    %v283 = vcvt.s32.f32 %v281
    %v284 = vcvt.s32.f32 %v282
    %v286 = vsel %vm176, %v283, 0
    %v289 = vsel %vm176, %v284, 0
    %291 = vmatpush.msra.mxu0 0.0
    %292 = vmatpush.msra.mxu0 0.0
    %293 = vmatpush.msra.mxu0 0.0
    %294 = vmatpush.msra.mxu0 0.0
    %295 = vmatpush.msra.mxu0 0.0
    %296 = vmatpush.msra.mxu0 0.0
    %297 = vmatpush.msra.mxu0 0.0
    %298 = vmatpush.msra.mxu0 0.0
    %299 = vmatpush.msra.mxu0 0.0
    %300 = vmatpush.msra.mxu0 0.0
    %301 = vmatpush.msra.mxu0 0.0
    %302 = vmatpush.msra.mxu0 0.0
    %303 = vmatpush.msra.mxu0 %v254
    %304 = vmatpush.msra.mxu0 %v253
    %305 = vmatpush.msra.mxu0 %v252
    %306 = vmatpush.msra.mxu0 %v251
    %307 = vmatmul.f32.gmra.mxu0 %v286
    %v308 = vpop.f32.mrf.mxu0
    %v309 = vadd.f32 0.0, %v308
    %310 = vmatmul.f32.gmra.mxu0 %v289
    %v311 = vpop.f32.mrf.mxu0
    %v312 = vadd.f32 0.0, %v311
    %313 = vdwg.mxu0
    %vm314 = vcmask 130048
    %v316 = vsel %vm314, %v269, 0
    %v319 = vsel %vm314, %v270, 0
    %321 = vmatpush.msra.mxu0 0.0
    %322 = vmatpush.msra.mxu0 0.0
    %323 = vmatpush.msra.mxu0 0.0
    %324 = vmatpush.msra.mxu0 0.0
    %325 = vmatpush.msra.mxu0 0.0
    %326 = vmatpush.msra.mxu0 0.0
    %327 = vmatpush.msra.mxu0 0.0
    %328 = vmatpush.msra.mxu0 0.0
    %329 = vmatpush.msra.mxu0 0.0
    %330 = vmatpush.msra.mxu0 0.0
    %331 = vmatpush.msra.mxu0 0.0
    %332 = vmatpush.msra.mxu0 0.0
    %333 = vmatpush.msra.mxu0 0.0
    %334 = vmatpush.msra.mxu0 0.0
    %335 = vmatpush.msra.mxu0 %v250
    %336 = vmatpush.msra.mxu0 %v249
    %337 = vmatmul.f32.gmra.mxu0 %v316
    %v338 = vpop.f32.mrf.mxu0
    %v339 = vadd.f32 %v309, %v338
    %340 = vmatmul.f32.gmra.mxu0 %v319
    %v341 = vpop.f32.mrf.mxu0
    %v342 = vadd.f32 %v312, %v341
    %343 = vdwg.mxu0
    %v344 = vtanh.pop %v339
    %v345 = vtanh.pop %v342
    %v346 = vmul.u32 %v146, %v162
    %v347 = vmul.u32 %v147, %v163
    %348 = vset.pattern.permute.xlu0 0
    %349 = vperm.xlu0 %348, %v346
    %v350 = vpop.permute.xlu0 %349
    %351 = vset.pattern.permute.xlu0 0
    %352 = vperm.xlu0 %351, %v347
    %v353 = vpop.permute.xlu0 %352
    %vm354 = vcmp.eq.s32.totalorder %v350, %v258
    %vm355 = vcmp.eq.s32.totalorder %v353, %v258
    %v356 = vsel %vm354, 1, 0
    %v357 = vsel %vm355, 1, 0
    %v358 = vcvt.s32.f32 %v356
    %v359 = vcvt.s32.f32 %v357
    %v360 = vmul.u32 %v148, %v162
    %v361 = vmul.u32 %v149, %v163
    %362 = vset.pattern.permute.xlu0 0
    %363 = vperm.xlu0 %362, %v360
    %v364 = vpop.permute.xlu0 %363
    %365 = vset.pattern.permute.xlu0 0
    %366 = vperm.xlu0 %365, %v361
    %v367 = vpop.permute.xlu0 %366
    %vm368 = vcmp.eq.s32.totalorder %v364, %v258
    %vm369 = vcmp.eq.s32.totalorder %v367, %v258
    %v370 = vsel %vm368, 1, 0
    %v371 = vsel %vm369, 1, 0
    %v372 = vcvt.s32.f32 %v370
    %v373 = vcvt.s32.f32 %v371
    %v375 = vsel %vm176, %v372, 0
    %v378 = vsel %vm176, %v373, 0
    %380 = vmatpush.msra.mxu0 0.0
    %381 = vmatpush.msra.mxu0 0.0
    %382 = vmatpush.msra.mxu0 0.0
    %383 = vmatpush.msra.mxu0 0.0
    %384 = vmatpush.msra.mxu0 0.0
    %385 = vmatpush.msra.mxu0 0.0
    %386 = vmatpush.msra.mxu0 0.0
    %387 = vmatpush.msra.mxu0 0.0
    %388 = vmatpush.msra.mxu0 0.0
    %389 = vmatpush.msra.mxu0 0.0
    %390 = vmatpush.msra.mxu0 0.0
    %391 = vmatpush.msra.mxu0 0.0
    %392 = vmatpush.msra.mxu0 %v254
    %393 = vmatpush.msra.mxu0 %v253
    %394 = vmatpush.msra.mxu0 %v252
    %395 = vmatpush.msra.mxu0 %v251
    %396 = vmatmul.f32.gmra.mxu0 %v375
    %v397 = vpop.f32.mrf.mxu0
    %v398 = vadd.f32 0.0, %v397
    %399 = vmatmul.f32.gmra.mxu0 %v378
    %v400 = vpop.f32.mrf.mxu0
    %v401 = vadd.f32 0.0, %v400
    %402 = vdwg.mxu0
    %v404 = vsel %vm314, %v358, 0
    %v407 = vsel %vm314, %v359, 0
    %409 = vmatpush.msra.mxu0 0.0
    %410 = vmatpush.msra.mxu0 0.0
    %411 = vmatpush.msra.mxu0 0.0
    %412 = vmatpush.msra.mxu0 0.0
    %413 = vmatpush.msra.mxu0 0.0
    %414 = vmatpush.msra.mxu0 0.0
    %415 = vmatpush.msra.mxu0 0.0
    %416 = vmatpush.msra.mxu0 0.0
    %417 = vmatpush.msra.mxu0 0.0
    %418 = vmatpush.msra.mxu0 0.0
    %419 = vmatpush.msra.mxu0 0.0
    %420 = vmatpush.msra.mxu0 0.0
    %421 = vmatpush.msra.mxu0 0.0
    %422 = vmatpush.msra.mxu0 0.0
    %423 = vmatpush.msra.mxu0 %v250
    %424 = vmatpush.msra.mxu0 %v249
    %425 = vmatmul.f32.gmra.mxu0 %v404
    %v426 = vpop.f32.mrf.mxu0
    %v427 = vadd.f32 %v398, %v426
    %428 = vmatmul.f32.gmra.mxu0 %v407
    %v429 = vpop.f32.mrf.mxu0
    %v430 = vadd.f32 %v401, %v429
    %431 = vdwg.mxu0
    %v432 = vtanh.pop %v427
    %v433 = vtanh.pop %v430
    %v434 = vld [vmem:[%s3] sm:$0xff]
    %435 = vset.pattern.permute.xlu0 0
    %436 = vperm.xlu0 %435, %v434
    %v437 = vpop.permute.xlu0 %436
    %vm438 = vcmp.eq.s32.totalorder %v437, %v258
    %v439 = vsel %vm438, 1, 0
    %v440 = vcvt.s32.f32 %v439
    %v441 = vld [vmem:[%s4] sm:$0xff]
    %442 = vset.pattern.permute.xlu0 0
    %443 = vperm.xlu0 %442, %v441
    %v444 = vpop.permute.xlu0 %443
    %vm445 = vcmp.eq.s32.totalorder %v444, %v258
    %v446 = vsel %vm445, 1, 0
    %v447 = vcvt.s32.f32 %v446
    %v449 = vsel %vm176, %v447, 0
    %451 = vmatpush.msra.mxu0 0.0
    %452 = vmatpush.msra.mxu0 0.0
    %453 = vmatpush.msra.mxu0 0.0
    %454 = vmatpush.msra.mxu0 0.0
    %455 = vmatpush.msra.mxu0 0.0
    %456 = vmatpush.msra.mxu0 0.0
    %457 = vmatpush.msra.mxu0 0.0
    %458 = vmatpush.msra.mxu0 0.0
    %459 = vmatpush.msra.mxu0 0.0
    %460 = vmatpush.msra.mxu0 0.0
    %461 = vmatpush.msra.mxu0 0.0
    %462 = vmatpush.msra.mxu0 0.0
    %463 = vmatpush.msra.mxu0 %v254
    %464 = vmatpush.msra.mxu0 %v253
    %465 = vmatpush.msra.mxu0 %v252
    %466 = vmatpush.msra.mxu0 %v251
    %467 = vmatmul.f32.gmra.mxu0 %v449
    %v468 = vpop.f32.mrf.mxu0
    %v469 = vadd.f32 0.0, %v468
    %470 = vdwg.mxu0
    %v472 = vsel %vm314, %v440, 0
    %474 = vmatpush.msra.mxu0 0.0
    %475 = vmatpush.msra.mxu0 0.0
    %476 = vmatpush.msra.mxu0 0.0
    %477 = vmatpush.msra.mxu0 0.0
    %478 = vmatpush.msra.mxu0 0.0
    %479 = vmatpush.msra.mxu0 0.0
    %480 = vmatpush.msra.mxu0 0.0
    %481 = vmatpush.msra.mxu0 0.0
    %482 = vmatpush.msra.mxu0 0.0
    %483 = vmatpush.msra.mxu0 0.0
    %484 = vmatpush.msra.mxu0 0.0
    %485 = vmatpush.msra.mxu0 0.0
    %486 = vmatpush.msra.mxu0 0.0
    %487 = vmatpush.msra.mxu0 0.0
    %488 = vmatpush.msra.mxu0 %v250
    %489 = vmatpush.msra.mxu0 %v249
    %490 = vmatmul.f32.gmra.mxu0 %v472
    %v491 = vpop.f32.mrf.mxu0
    %v492 = vadd.f32 %v469, %v491
    %493 = vdwg.mxu0
    %v494 = vtanh.pop %v492
    %v495 = vld [vmem:[%s11] sm:$0xff]
    %v496 = vld [vmem:[%s11 + $0x8] sm:$0xff]
    %v497 = vld [vmem:[%s11 + $0x10] sm:$0xff]
    %v498 = vld [vmem:[%s11 + $0x18] sm:$0xff]
    %v499 = vld [vmem:[%s11 + $0x20] sm:$0xff]
    %v500 = vld [vmem:[%s11 + $0x28] sm:$0xff]
    %v501 = vperm.slane %v499, 0
    %v503 = vsel %vm176, %v229, 0
    %v506 = vsel %vm176, %v230, 0
    %508 = vmatpush.msra.mxu0 0.0
    %509 = vmatpush.msra.mxu0 0.0
    %510 = vmatpush.msra.mxu0 0.0
    %511 = vmatpush.msra.mxu0 0.0
    %512 = vmatpush.msra.mxu0 0.0
    %513 = vmatpush.msra.mxu0 0.0
    %514 = vmatpush.msra.mxu0 0.0
    %515 = vmatpush.msra.mxu0 0.0
    %516 = vmatpush.msra.mxu0 0.0
    %517 = vmatpush.msra.mxu0 0.0
    %518 = vmatpush.msra.mxu0 0.0
    %519 = vmatpush.msra.mxu0 0.0
    %520 = vmatpush.msra.mxu0 %v498
    %521 = vmatpush.msra.mxu0 %v497
    %522 = vmatpush.msra.mxu0 %v496
    %523 = vmatpush.msra.mxu0 %v495
    %524 = vmatmul.f32.gmra.mxu0 %v503
    %v525 = vpop.f32.mrf.mxu0
    %v526 = vadd.f32 %v501, %v525
    %527 = vmatmul.f32.gmra.mxu0 %v506
    %v528 = vpop.f32.mrf.mxu0
    %v529 = vadd.f32 %v501, %v528
    %530 = vdwg.mxu0
    %v531 = vtanh.pop %v526
    %v532 = vtanh.pop %v529
    %v533 = vperm.slane %v500, 0
    %v534 = vmul.f32 %v531, %v533
    %v535 = vmul.f32 %v532, %v533
    %v536 = vsel %vm314, %v534, 0.0
    %537 = vadd.xlane.f32.xlu0 %v536
    %v538 = vpop.xlane.xlu0 %537
    %v539 = vsel %vm314, %v535, 0.0
    %540 = vadd.xlane.f32.xlu0 %v539
    %v541 = vpop.xlane.xlu0 %540
    %v542 = vrot.slane %v538, 4
    %v543 = vmax.f32 %v538, %v542
    %v544 = vrot.slane %v543, 2
    %v545 = vmax.f32 %v543, %v544
    %v546 = vrot.slane %v545, 1
    %v547 = vmax.f32 %v545, %v546
    %v548 = vsub.f32 %v538, %v547
    %v549 = vmul.f32 %v548, 1.442695
    %v550 = vpow.pop %v549
    %v551 = vrot.slane %v550, 4
    %v552 = vadd.f32 %v550, %v551
    %v553 = vrot.slane %v552, 2
    %v554 = vadd.f32 %v552, %v553
    %v555 = vrot.slane %v554, 1
    %v556 = vadd.f32 %v554, %v555
    %v557 = vrcp.pop %v556
    %v558 = vmul.f32 %v556, %v557
    %v559 = vsub.f32 1.0, %v558
    %v560 = vmul.f32 %v557, %v559
    %v561 = vadd.f32 %v557, %v560
    %vm562 = vweird.f32 %v556
    %vm563 = vweird.f32 %v557
    %vm564 = vmor %vm562, %vm563
    %v565 = vsel %vm564, %v557, %v561
    %v566 = vand.u32 2147483647, %v556
    %vm567 = vcmp.eq.f32.partialorder %v566, 8.507059e+37
    %v568 = vand.u32 %v556, 2147483648
    %v569 = vor.u32 1.1754944e-38, %v568
    %v570 = vsel %vm567, %v569, %v565
    %v571 = vmul.f32 %v550, %v570
    %v572 = vmul.f32 %v571, %v229
    %v573 = vsel %vm176, %v572, 0.0
    %v574 = vrot.slane %v573, 4
    %v575 = vadd.f32 %v573, %v574
    %v576 = vrot.slane %v575, 2
    %v577 = vadd.f32 %v575, %v576
    %v578 = vrot.slane %v577, 1
    %v579 = vadd.f32 %v577, %v578
    %v580 = vrot.slane %v541, 4
    %v581 = vmax.f32 %v541, %v580
    %v582 = vrot.slane %v581, 2
    %v583 = vmax.f32 %v581, %v582
    %v584 = vrot.slane %v583, 1
    %v585 = vmax.f32 %v583, %v584
    %v586 = vsub.f32 %v541, %v585
    %v587 = vmul.f32 %v586, 1.442695
    %v588 = vpow.pop %v587
    %v589 = vrot.slane %v588, 4
    %v590 = vadd.f32 %v588, %v589
    %v591 = vrot.slane %v590, 2
    %v592 = vadd.f32 %v590, %v591
    %v593 = vrot.slane %v592, 1
    %v594 = vadd.f32 %v592, %v593
    %v595 = vrcp.pop %v594
    %v596 = vmul.f32 %v594, %v595
    %v597 = vsub.f32 1.0, %v596
    %v598 = vmul.f32 %v595, %v597
    %v599 = vadd.f32 %v595, %v598
    %vm600 = vweird.f32 %v594
    %vm601 = vweird.f32 %v595
    %vm602 = vmor %vm600, %vm601
    %v603 = vsel %vm602, %v595, %v599
    %v604 = vand.u32 2147483647, %v594
    %vm605 = vcmp.eq.f32.partialorder %v604, 8.507059e+37
    %v606 = vand.u32 %v594, 2147483648
    %v607 = vor.u32 1.1754944e-38, %v606
    %v608 = vsel %vm605, %v607, %v603
    %v609 = vmul.f32 %v588, %v608
    %v610 = vmul.f32 %v609, %v230
    %v611 = vsel %vm176, %v610, 0.0
    %v612 = vrot.slane %v611, 4
    %v613 = vadd.f32 %v611, %v612
    %v614 = vrot.slane %v613, 2
    %v615 = vadd.f32 %v613, %v614
    %v616 = vrot.slane %v615, 1
    %v617 = vadd.f32 %v615, %v616
    %vm618 = vcmask 1040384
    %v619 = vsel %vm618, %v579, %v617
    %v620 = vld [vmem:[%s12] sm:$0xff]
    %v621 = vld [vmem:[%s12 + $0x8] sm:$0xff]
    %v622 = vld [vmem:[%s12 + $0x10] sm:$0xff]
    %v623 = vld [vmem:[%s12 + $0x18] sm:$0xff]
    %v624 = vld [vmem:[%s12 + $0x20] sm:$0xff]
    %v625 = vld [vmem:[%s12 + $0x28] sm:$0xff]
    %v626 = vperm.slane %v624, 0
    %v628 = vsel %vm176, %v245, 0
    %v631 = vsel %vm176, %v246, 0
    %633 = vmatpush.msra.mxu0 0.0
    %634 = vmatpush.msra.mxu0 0.0
    %635 = vmatpush.msra.mxu0 0.0
    %636 = vmatpush.msra.mxu0 0.0
    %637 = vmatpush.msra.mxu0 0.0
    %638 = vmatpush.msra.mxu0 0.0
    %639 = vmatpush.msra.mxu0 0.0
    %640 = vmatpush.msra.mxu0 0.0
    %641 = vmatpush.msra.mxu0 0.0
    %642 = vmatpush.msra.mxu0 0.0
    %643 = vmatpush.msra.mxu0 0.0
    %644 = vmatpush.msra.mxu0 0.0
    %645 = vmatpush.msra.mxu0 %v623
    %646 = vmatpush.msra.mxu0 %v622
    %647 = vmatpush.msra.mxu0 %v621
    %648 = vmatpush.msra.mxu0 %v620
    %649 = vmatmul.f32.gmra.mxu0 %v628
    %v650 = vpop.f32.mrf.mxu0
    %v651 = vadd.f32 %v626, %v650
    %652 = vmatmul.f32.gmra.mxu0 %v631
    %v653 = vpop.f32.mrf.mxu0
    %v654 = vadd.f32 %v626, %v653
    %655 = vdwg.mxu0
    %v656 = vtanh.pop %v651
    %v657 = vtanh.pop %v654
    %v658 = vperm.slane %v625, 0
    %v659 = vmul.f32 %v656, %v658
    %v660 = vmul.f32 %v657, %v658
    %v661 = vsel %vm314, %v659, 0.0
    %662 = vadd.xlane.f32.xlu0 %v661
    %v663 = vpop.xlane.xlu0 %662
    %v664 = vsel %vm314, %v660, 0.0
    %665 = vadd.xlane.f32.xlu0 %v664
    %v666 = vpop.xlane.xlu0 %665
    %v667 = vrot.slane %v663, 4
    %v668 = vmax.f32 %v663, %v667
    %v669 = vrot.slane %v668, 2
    %v670 = vmax.f32 %v668, %v669
    %v671 = vrot.slane %v670, 1
    %v672 = vmax.f32 %v670, %v671
    %v673 = vsub.f32 %v663, %v672
    %v674 = vmul.f32 %v673, 1.442695
    %v675 = vpow.pop %v674
    %v676 = vrot.slane %v675, 4
    %v677 = vadd.f32 %v675, %v676
    %v678 = vrot.slane %v677, 2
    %v679 = vadd.f32 %v677, %v678
    %v680 = vrot.slane %v679, 1
    %v681 = vadd.f32 %v679, %v680
    %v682 = vrcp.pop %v681
    %v683 = vmul.f32 %v681, %v682
    %v684 = vsub.f32 1.0, %v683
    %v685 = vmul.f32 %v682, %v684
    %v686 = vadd.f32 %v682, %v685
    %vm687 = vweird.f32 %v681
    %vm688 = vweird.f32 %v682
    %vm689 = vmor %vm687, %vm688
    %v690 = vsel %vm689, %v682, %v686
    %v691 = vand.u32 2147483647, %v681
    %vm692 = vcmp.eq.f32.partialorder %v691, 8.507059e+37
    %v693 = vand.u32 %v681, 2147483648
    %v694 = vor.u32 1.1754944e-38, %v693
    %v695 = vsel %vm692, %v694, %v690
    %v696 = vmul.f32 %v675, %v695
    %v697 = vmul.f32 %v696, %v245
    %v698 = vsel %vm176, %v697, 0.0
    %v699 = vrot.slane %v698, 4
    %v700 = vadd.f32 %v698, %v699
    %v701 = vrot.slane %v700, 2
    %v702 = vadd.f32 %v700, %v701
    %v703 = vrot.slane %v702, 1
    %v704 = vadd.f32 %v702, %v703
    %v705 = vrot.slane %v666, 4
    %v706 = vmax.f32 %v666, %v705
    %v707 = vrot.slane %v706, 2
    %v708 = vmax.f32 %v706, %v707
    %v709 = vrot.slane %v708, 1
    %v710 = vmax.f32 %v708, %v709
    %v711 = vsub.f32 %v666, %v710
    %v712 = vmul.f32 %v711, 1.442695
    %v713 = vpow.pop %v712
    %v714 = vrot.slane %v713, 4
    %v715 = vadd.f32 %v713, %v714
    %v716 = vrot.slane %v715, 2
    %v717 = vadd.f32 %v715, %v716
    %v718 = vrot.slane %v717, 1
    %v719 = vadd.f32 %v717, %v718
    %v720 = vrcp.pop %v719
    %v721 = vmul.f32 %v719, %v720
    %v722 = vsub.f32 1.0, %v721
    %v723 = vmul.f32 %v720, %v722
    %v724 = vadd.f32 %v720, %v723
    %vm725 = vweird.f32 %v719
    %vm726 = vweird.f32 %v720
    %vm727 = vmor %vm725, %vm726
    %v728 = vsel %vm727, %v720, %v724
    %v729 = vand.u32 2147483647, %v719
    %vm730 = vcmp.eq.f32.partialorder %v729, 8.507059e+37
    %v731 = vand.u32 %v719, 2147483648
    %v732 = vor.u32 1.1754944e-38, %v731
    %v733 = vsel %vm730, %v732, %v728
    %v734 = vmul.f32 %v713, %v733
    %v735 = vmul.f32 %v734, %v246
    %v736 = vsel %vm176, %v735, 0.0
    %v737 = vrot.slane %v736, 4
    %v738 = vadd.f32 %v736, %v737
    %v739 = vrot.slane %v738, 2
    %v740 = vadd.f32 %v738, %v739
    %v741 = vrot.slane %v740, 1
    %v742 = vadd.f32 %v740, %v741
    %v743 = vsel %vm618, %v704, %v742
    %v744 = vld [vmem:[#allocation7] sm:$0xff]
    %v745 = vld [vmem:[#allocation7 + $0x8] sm:$0xff]
    %v746 = vld [vmem:[#allocation7 + $0x10] sm:$0xff]
    %v747 = vld [vmem:[#allocation7 + $0x18] sm:$0xff]
    %v748 = vperm.slane %v746, 0
    %v750 = vsel %vm314, %v344, 0
    %v753 = vsel %vm314, %v345, 0
    %755 = vmatpush.msra.mxu0 0.0
    %756 = vmatpush.msra.mxu0 0.0
    %757 = vmatpush.msra.mxu0 0.0
    %758 = vmatpush.msra.mxu0 0.0
    %759 = vmatpush.msra.mxu0 0.0
    %760 = vmatpush.msra.mxu0 0.0
    %761 = vmatpush.msra.mxu0 0.0
    %762 = vmatpush.msra.mxu0 0.0
    %763 = vmatpush.msra.mxu0 0.0
    %764 = vmatpush.msra.mxu0 0.0
    %765 = vmatpush.msra.mxu0 0.0
    %766 = vmatpush.msra.mxu0 0.0
    %767 = vmatpush.msra.mxu0 0.0
    %768 = vmatpush.msra.mxu0 0.0
    %769 = vmatpush.msra.mxu0 %v745
    %770 = vmatpush.msra.mxu0 %v744
    %771 = vmatmul.f32.gmra.mxu0 %v750
    %v772 = vpop.f32.mrf.mxu0
    %v773 = vadd.f32 %v748, %v772
    %774 = vmatmul.f32.gmra.mxu0 %v753
    %v775 = vpop.f32.mrf.mxu0
    %v776 = vadd.f32 %v748, %v775
    %777 = vdwg.mxu0
    %v778 = vtanh.pop %v773
    %v779 = vtanh.pop %v776
    %v780 = vperm.slane %v747, 0
    %v781 = vmul.f32 %v778, %v780
    %v782 = vmul.f32 %v779, %v780
    %v783 = vsel %vm314, %v781, 0.0
    %784 = vadd.xlane.f32.xlu0 %v783
    %v785 = vpop.xlane.xlu0 %784
    %v786 = vsel %vm314, %v782, 0.0
    %787 = vadd.xlane.f32.xlu0 %v786
    %v788 = vpop.xlane.xlu0 %787
    %v789 = vrot.slane %v785, 4
    %v790 = vmax.f32 %v785, %v789
    %v791 = vrot.slane %v790, 2
    %v792 = vmax.f32 %v790, %v791
    %v793 = vrot.slane %v792, 1
    %v794 = vmax.f32 %v792, %v793
    %v795 = vsub.f32 %v785, %v794
    %v796 = vmul.f32 %v795, 1.442695
    %v797 = vpow.pop %v796
    %v798 = vrot.slane %v797, 4
    %v799 = vadd.f32 %v797, %v798
    %v800 = vrot.slane %v799, 2
    %v801 = vadd.f32 %v799, %v800
    %v802 = vrot.slane %v801, 1
    %v803 = vadd.f32 %v801, %v802
    %v804 = vrcp.pop %v803
    %v805 = vmul.f32 %v803, %v804
    %v806 = vsub.f32 1.0, %v805
    %v807 = vmul.f32 %v804, %v806
    %v808 = vadd.f32 %v804, %v807
    %vm809 = vweird.f32 %v803
    %vm810 = vweird.f32 %v804
    %vm811 = vmor %vm809, %vm810
    %v812 = vsel %vm811, %v804, %v808
    %v813 = vand.u32 2147483647, %v803
    %vm814 = vcmp.eq.f32.partialorder %v813, 8.507059e+37
    %v815 = vand.u32 %v803, 2147483648
    %v816 = vor.u32 1.1754944e-38, %v815
    %v817 = vsel %vm814, %v816, %v812
    %v818 = vmul.f32 %v797, %v817
    %v819 = vmul.f32 %v818, %v344
    %v820 = vsel %vm314, %v819, 0.0
    %v821 = vrot.slane %v820, 4
    %v822 = vadd.f32 %v820, %v821
    %v823 = vrot.slane %v822, 2
    %v824 = vadd.f32 %v822, %v823
    %v825 = vrot.slane %v824, 1
    %v826 = vadd.f32 %v824, %v825
    %v827 = vrot.slane %v788, 4
    %v828 = vmax.f32 %v788, %v827
    %v829 = vrot.slane %v828, 2
    %v830 = vmax.f32 %v828, %v829
    %v831 = vrot.slane %v830, 1
    %v832 = vmax.f32 %v830, %v831
    %v833 = vsub.f32 %v788, %v832
    %v834 = vmul.f32 %v833, 1.442695
    %v835 = vpow.pop %v834
    %v836 = vrot.slane %v835, 4
    %v837 = vadd.f32 %v835, %v836
    %v838 = vrot.slane %v837, 2
    %v839 = vadd.f32 %v837, %v838
    %v840 = vrot.slane %v839, 1
    %v841 = vadd.f32 %v839, %v840
    %v842 = vrcp.pop %v841
    %v843 = vmul.f32 %v841, %v842
    %v844 = vsub.f32 1.0, %v843
    %v845 = vmul.f32 %v842, %v844
    %v846 = vadd.f32 %v842, %v845
    %vm847 = vweird.f32 %v841
    %vm848 = vweird.f32 %v842
    %vm849 = vmor %vm847, %vm848
    %v850 = vsel %vm849, %v842, %v846
    %v851 = vand.u32 2147483647, %v841
    %vm852 = vcmp.eq.f32.partialorder %v851, 8.507059e+37
    %v853 = vand.u32 %v841, 2147483648
    %v854 = vor.u32 1.1754944e-38, %v853
    %v855 = vsel %vm852, %v854, %v850
    %v856 = vmul.f32 %v835, %v855
    %v857 = vmul.f32 %v856, %v345
    %v858 = vsel %vm314, %v857, 0.0
    %v859 = vrot.slane %v858, 4
    %v860 = vadd.f32 %v858, %v859
    %v861 = vrot.slane %v860, 2
    %v862 = vadd.f32 %v860, %v861
    %v863 = vrot.slane %v862, 1
    %v864 = vadd.f32 %v862, %v863
    %v865 = vsel %vm618, %v826, %v864
    %v866 = vld [vmem:[#allocation9] sm:$0xff]
    %v867 = vld [vmem:[#allocation9 + $0x8] sm:$0xff]
    %v868 = vld [vmem:[#allocation9 + $0x10] sm:$0xff]
    %v869 = vld [vmem:[#allocation9 + $0x18] sm:$0xff]
    %v870 = vperm.slane %v868, 0
    %v872 = vsel %vm314, %v432, 0
    %v875 = vsel %vm314, %v433, 0
    %877 = vmatpush.msra.mxu0 0.0
    %878 = vmatpush.msra.mxu0 0.0
    %879 = vmatpush.msra.mxu0 0.0
    %880 = vmatpush.msra.mxu0 0.0
    %881 = vmatpush.msra.mxu0 0.0
    %882 = vmatpush.msra.mxu0 0.0
    %883 = vmatpush.msra.mxu0 0.0
    %884 = vmatpush.msra.mxu0 0.0
    %885 = vmatpush.msra.mxu0 0.0
    %886 = vmatpush.msra.mxu0 0.0
    %887 = vmatpush.msra.mxu0 0.0
    %888 = vmatpush.msra.mxu0 0.0
    %889 = vmatpush.msra.mxu0 0.0
    %890 = vmatpush.msra.mxu0 0.0
    %891 = vmatpush.msra.mxu0 %v867
    %892 = vmatpush.msra.mxu0 %v866
    %893 = vmatmul.f32.gmra.mxu0 %v872
    %v894 = vpop.f32.mrf.mxu0
    %v895 = vadd.f32 %v870, %v894
    %896 = vmatmul.f32.gmra.mxu0 %v875
    %v897 = vpop.f32.mrf.mxu0
    %v898 = vadd.f32 %v870, %v897
    %899 = vdwg.mxu0
    %v900 = vtanh.pop %v895
    %v901 = vtanh.pop %v898
    %v902 = vperm.slane %v869, 0
    %v903 = vmul.f32 %v900, %v902
    %v904 = vmul.f32 %v901, %v902
    %v905 = vsel %vm314, %v903, 0.0
    %906 = vadd.xlane.f32.xlu0 %v905
    %v907 = vpop.xlane.xlu0 %906
    %v908 = vsel %vm314, %v904, 0.0
    %909 = vadd.xlane.f32.xlu0 %v908
    %v910 = vpop.xlane.xlu0 %909
    %v911 = vrot.slane %v907, 4
    %v912 = vmax.f32 %v907, %v911
    %v913 = vrot.slane %v912, 2
    %v914 = vmax.f32 %v912, %v913
    %v915 = vrot.slane %v914, 1
    %v916 = vmax.f32 %v914, %v915
    %v917 = vsub.f32 %v907, %v916
    %v918 = vmul.f32 %v917, 1.442695
    %v919 = vpow.pop %v918
    %v920 = vrot.slane %v919, 4
    %v921 = vadd.f32 %v919, %v920
    %v922 = vrot.slane %v921, 2
    %v923 = vadd.f32 %v921, %v922
    %v924 = vrot.slane %v923, 1
    %v925 = vadd.f32 %v923, %v924
    %v926 = vrcp.pop %v925
    %v927 = vmul.f32 %v925, %v926
    %v928 = vsub.f32 1.0, %v927
    %v929 = vmul.f32 %v926, %v928
    %v930 = vadd.f32 %v926, %v929
    %vm931 = vweird.f32 %v925
    %vm932 = vweird.f32 %v926
    %vm933 = vmor %vm931, %vm932
    %v934 = vsel %vm933, %v926, %v930
    %v935 = vand.u32 2147483647, %v925
    %vm936 = vcmp.eq.f32.partialorder %v935, 8.507059e+37
    %v937 = vand.u32 %v925, 2147483648
    %v938 = vor.u32 1.1754944e-38, %v937
    %v939 = vsel %vm936, %v938, %v934
    %v940 = vmul.f32 %v919, %v939
    %v941 = vmul.f32 %v940, %v432
    %v942 = vsel %vm314, %v941, 0.0
    %v943 = vrot.slane %v942, 4
    %v944 = vadd.f32 %v942, %v943
    %v945 = vrot.slane %v944, 2
    %v946 = vadd.f32 %v944, %v945
    %v947 = vrot.slane %v946, 1
    %v948 = vadd.f32 %v946, %v947
    %v949 = vrot.slane %v910, 4
    %v950 = vmax.f32 %v910, %v949
    %v951 = vrot.slane %v950, 2
    %v952 = vmax.f32 %v950, %v951
    %v953 = vrot.slane %v952, 1
    %v954 = vmax.f32 %v952, %v953
    %v955 = vsub.f32 %v910, %v954
    %v956 = vmul.f32 %v955, 1.442695
    %v957 = vpow.pop %v956
    %v958 = vrot.slane %v957, 4
    %v959 = vadd.f32 %v957, %v958
    %v960 = vrot.slane %v959, 2
    %v961 = vadd.f32 %v959, %v960
    %v962 = vrot.slane %v961, 1
    %v963 = vadd.f32 %v961, %v962
    %v964 = vrcp.pop %v963
    %v965 = vmul.f32 %v963, %v964
    %v966 = vsub.f32 1.0, %v965
    %v967 = vmul.f32 %v964, %v966
    %v968 = vadd.f32 %v964, %v967
    %vm969 = vweird.f32 %v963
    %vm970 = vweird.f32 %v964
    %vm971 = vmor %vm969, %vm970
    %v972 = vsel %vm971, %v964, %v968
    %v973 = vand.u32 2147483647, %v963
    %vm974 = vcmp.eq.f32.partialorder %v973, 8.507059e+37
    %v975 = vand.u32 %v963, 2147483648
    %v976 = vor.u32 1.1754944e-38, %v975
    %v977 = vsel %vm974, %v976, %v972
    %v978 = vmul.f32 %v957, %v977
    %v979 = vmul.f32 %v978, %v433
    %v980 = vsel %vm314, %v979, 0.0
    %v981 = vrot.slane %v980, 4
    %v982 = vadd.f32 %v980, %v981
    %v983 = vrot.slane %v982, 2
    %v984 = vadd.f32 %v982, %v983
    %v985 = vrot.slane %v984, 1
    %v986 = vadd.f32 %v984, %v985
    %v987 = vsel %vm618, %v948, %v986
    %v988 = vld [vmem:[%s20] sm:$0x1]
    %v989 = vld [vmem:[%s18] sm:$0x1]
    %v991 = vperm.slane %v989, 0
    %v993 = vmul.f32 %v619, %v991
    %vm994 = vcmask 254976
    %v995 = vsel %vm994, %v993, 0.0
    %996 = vadd.xlane.f32.xlu0 %v995
    %v997 = vpop.xlane.xlu0 %996
    %s998 = vtos %v988
    %v999 = vstv %s998
    %v1000 = vadd.f32 %v997, %v999
    %v1001 = vld [vmem:[%s19] sm:$0x1]
    %v1003 = vperm.slane %v1001, 0
    %v1005 = vmul.f32 %v865, %v1003
    %vm1006 = vcmask 123904
    %v1007 = vsel %vm1006, %v1005, 0.0
    %1008 = vadd.xlane.f32.xlu0 %v1007
    %v1009 = vpop.xlane.xlu0 %1008
    %1010 = vrot.lane.b32.xlu0 %v988, 127
    %v1011 = vpop.permute.xlu0 %1010
    %s1012 = vtos %v1011
    %v1013 = vstv %s1012
    %v1014 = vadd.f32 %v1009, %v1013
    %v1015 = vmul.f32 %v1000, 0.5
    %v1016 = vmul.f32 %v1014, 0.5
    %v1017 = vadd.f32 %v1015, %v1016
    %v1018 = vld [vmem:[%s5] sm:$0xff]
    %v1019 = vld [vmem:[%s5 + $0x8] sm:$0xff]
    %v1020 = vmul.f32 %v1018, %v166
    %v1021 = vmul.f32 %v1019, %v167
    %v1022 = vld [vmem:[%s6] sm:$0xff]
    %v1023 = vld [vmem:[%s6 + $0x8] sm:$0xff]
    %v1024 = vmul.f32 %v1022, %v166
    %v1025 = vmul.f32 %v1023, %v167
    %vm1026 = vcmask 7168
    %v1027 = vsel %vm1026, %v1020, 0.0
    %v1028 = vrot.slane %v1027, 4
    %v1029 = vadd.f32 %v1027, %v1028
    %v1030 = vrot.slane %v1029, 2
    %v1031 = vadd.f32 %v1029, %v1030
    %v1032 = vrot.slane %v1031, 1
    %v1033 = vadd.f32 %v1031, %v1032
    %v1034 = vsel %vm1026, %v1024, 0.0
    %v1035 = vrot.slane %v1034, 4
    %v1036 = vadd.f32 %v1034, %v1035
    %v1037 = vrot.slane %v1036, 2
    %v1038 = vadd.f32 %v1036, %v1037
    %v1039 = vrot.slane %v1038, 1
    %v1040 = vadd.f32 %v1038, %v1039
    %v1041 = vsel %vm1026, %v1021, 0.0
    %v1042 = vrot.slane %v1041, 4
    %v1043 = vadd.f32 %v1041, %v1042
    %v1044 = vrot.slane %v1043, 2
    %v1045 = vadd.f32 %v1043, %v1044
    %v1046 = vrot.slane %v1045, 1
    %v1047 = vadd.f32 %v1045, %v1046
    %v1048 = vsel %vm1026, %v1025, 0.0
    %v1049 = vrot.slane %v1048, 4
    %v1050 = vadd.f32 %v1048, %v1049
    %v1051 = vrot.slane %v1050, 2
    %v1052 = vadd.f32 %v1050, %v1051
    %v1053 = vrot.slane %v1052, 1
    %v1054 = vadd.f32 %v1052, %v1053
    %v1055 = vsel %vm618, %v1033, %v1047
    %v1056 = vadd.f32 %v1055, 1.0
    %v1057 = vsel %vm618, %v1040, %v1054
    %v1058 = vadd.f32 %v1057, 1.0
    %v1059 = vrcp.pop %v1056
    %v1060 = vmul.f32 %v1056, %v1059
    %v1061 = vsub.f32 1.0, %v1060
    %v1062 = vmul.f32 %v1059, %v1061
    %v1063 = vadd.f32 %v1059, %v1062
    %vm1064 = vweird.f32 %v1056
    %vm1065 = vweird.f32 %v1059
    %vm1066 = vmor %vm1064, %vm1065
    %v1067 = vsel %vm1066, %v1059, %v1063
    %v1068 = vand.u32 2147483647, %v1056
    %vm1069 = vcmp.eq.f32.partialorder %v1068, 8.507059e+37
    %v1070 = vand.u32 %v1056, 2147483648
    %v1071 = vor.u32 1.1754944e-38, %v1070
    %v1072 = vsel %vm1069, %v1071, %v1067
    %v1073 = vmul.f32 %v1058, %v1072
    %v1074 = vsub.f32 %v1073, 1.0
    %v1075 = vld [vmem:[%s15] sm:$0x3]
    %v1076 = vld [vmem:[%s16] sm:$0x3]
    %v1077 = vld [vmem:[%s17] sm:$0x1]
    %v1078 = vperm.slane %v1075, 0
    %v1079 = vmul.f32 %v619, %v1078
    %v1080 = vsel %vm994, %v1079, 0.0
    %1081 = vadd.xlane.f32.xlu0 %v1080
    %v1082 = vpop.xlane.xlu0 %1081
    %s1083 = vtos %v1077
    %v1084 = vstv %s1083
    %v1085 = vadd.f32 %v1082, %v1084
    %v1086 = vperm.slane %v1075, 1
    %v1087 = vmul.f32 %v743, %v1086
    %v1088 = vsel %vm994, %v1087, 0.0
    %1089 = vadd.xlane.f32.xlu0 %v1088
    %v1090 = vpop.xlane.xlu0 %1089
    %1091 = vrot.lane.b32.xlu0 %v1077, 127
    %v1092 = vpop.permute.xlu0 %1091
    %s1093 = vtos %v1092
    %v1094 = vstv %s1093
    %v1095 = vadd.f32 %v1090, %v1094
    %v1096 = vperm.slane %v1076, 0
    %v1097 = vmul.f32 %v865, %v1096
    %v1098 = vsel %vm1006, %v1097, 0.0
    %1099 = vadd.xlane.f32.xlu0 %v1098
    %v1100 = vpop.xlane.xlu0 %1099
    %1101 = vrot.lane.b32.xlu0 %v1077, 126
    %v1102 = vpop.permute.xlu0 %1101
    %s1103 = vtos %v1102
    %v1104 = vstv %s1103
    %v1105 = vadd.f32 %v1100, %v1104
    %v1106 = vperm.slane %v1076, 1
    %v1107 = vmul.f32 %v987, %v1106
    %v1108 = vsel %vm1006, %v1107, 0.0
    %1109 = vadd.xlane.f32.xlu0 %v1108
    %v1110 = vpop.xlane.xlu0 %1109
    %1111 = vrot.lane.b32.xlu0 %v1077, 125
    %v1112 = vpop.permute.xlu0 %1111
    %s1113 = vtos %v1112
    %v1114 = vstv %s1113
    %v1115 = vadd.f32 %v1110, %v1114
    %v1116 = vmax.f32 %v1085, %v1095
    %v1117 = vmax.f32 %v1105, %v1115
    %v1118 = vmax.f32 %v1116, %v1117
    %v1119 = vsub.f32 %v1085, %v1118
    %v1120 = vmul.f32 %v1119, 1.442695
    %v1121 = vpow.pop %v1120
    %v1122 = vsub.f32 %v1095, %v1118
    %v1123 = vmul.f32 %v1122, 1.442695
    %v1124 = vpow.pop %v1123
    %v1125 = vsub.f32 %v1105, %v1118
    %v1126 = vmul.f32 %v1125, 1.442695
    %v1127 = vpow.pop %v1126
    %v1128 = vsub.f32 %v1115, %v1118
    %v1129 = vmul.f32 %v1128, 1.442695
    %v1130 = vpow.pop %v1129
    %v1131 = vadd.f32 %v1121, %v1124
    %v1132 = vadd.f32 %v1131, %v1127
    %v1133 = vadd.f32 %v1132, %v1130
    %v1134 = vrcp.pop %v1133
    %v1135 = vmul.f32 %v1133, %v1134
    %v1136 = vsub.f32 1.0, %v1135
    %v1137 = vmul.f32 %v1134, %v1136
    %v1138 = vadd.f32 %v1134, %v1137
    %vm1139 = vweird.f32 %v1133
    %vm1140 = vweird.f32 %v1134
    %vm1141 = vmor %vm1139, %vm1140
    %v1142 = vsel %vm1141, %v1134, %v1138
    %v1143 = vand.u32 2147483647, %v1133
    %vm1144 = vcmp.eq.f32.partialorder %v1143, 8.507059e+37
    %v1145 = vand.u32 %v1133, 2147483648
    %v1146 = vor.u32 1.1754944e-38, %v1145
    %v1147 = vsel %vm1144, %v1146, %v1142
    %v1148 = vmul.f32 1.0, %v1147
    %v1149 = vmul.f32 %v1121, %v619
    %v1150 = vmul.f32 %v1124, %v1074
    %1152 = vset.pattern.permute.xlu0 0
    %1153 = vperm.xlu0 %1152, %v1150
    %v1154 = vpop.permute.xlu0 %1153
    %v1156 = vmul.f32 %v1154, %v743
    %v1157 = vadd.f32 %v1149, %v1156
    %v1158 = vmul.f32 %v1157, %v1148
    %v1159 = vmul.f32 %v1127, %v865
    %v1160 = vmul.f32 %v1130, %v1074
    %1162 = vset.pattern.permute.xlu0 0
    %1163 = vperm.xlu0 %1162, %v1160
    %v1164 = vpop.permute.xlu0 %1163
    %v1166 = vmul.f32 %v1164, %v987
    %v1167 = vadd.f32 %v1159, %v1166
    %v1168 = vmul.f32 %v1167, %v1148
    %1169 = vst [vmem:[%s21] sm:$0x3] 0.0
    %v1170 = vperm.slane %v1158, 0
    %v1171 = vmul.f32 %v248, %v1170
    %vm1172 = vcmask 257024
    %v1173 = vsel %vm1172, %v1171, 0.0
    %1174 = vadd.xlane.f32.xlu0 %v1173
    %v1175 = vpop.xlane.xlu0 %1174
    %v1176 = vperm.slane %v1168, 0
    %v1177 = vmul.f32 %v494, %v1176
    %vm1178 = vcmask 125952
    %v1179 = vsel %vm1178, %v1177, 0.0
    %1180 = vadd.xlane.f32.xlu0 %v1179
    %v1181 = vpop.xlane.xlu0 %1180
    %v1182 = vadd.f32 %v1175, %v1181
    %v1184 = vperm.slane %v1182, %v258
    %vm1186 = vcmask 24576
    %1187 = vst.msk [vmem:[%s21] sm:$0x1] %vm1186, %v1184
    %v1188 = vperm.slane %v1158, 1
    %v1189 = vmul.f32 %v248, %v1188
    %vm1190 = vcmask 261124
    %v1191 = vsel %vm1190, %v1189, 0.0
    %1192 = vadd.xlane.f32.xlu0 %v1191
    %v1193 = vpop.xlane.xlu0 %1192
    %v1194 = vperm.slane %v1168, 1
    %v1195 = vmul.f32 %v494, %v1194
    %vm1196 = vcmask 130052
    %v1197 = vsel %vm1196, %v1195, 0.0
    %1198 = vadd.xlane.f32.xlu0 %v1197
    %v1199 = vpop.xlane.xlu0 %1198
    %v1200 = vadd.f32 %v1193, %v1199
    %v1202 = vadd.s32 %v258, 4
    %v1203 = vperm.slane %v1200, %v1202
    %vm1205 = vcmask 28676
    %1206 = vst.msk [vmem:[%s21 - $0x3] sm:$0x10] %vm1205, %v1203
    %vm1207 = vcmask 33824
    %1208 = vst.msk [vmem:[%s21] sm:$0x3] %vm1207, %v1017
    // Predicated region
    $region106: #{hpdm_forward.1} parent=1 // pred_check
      _
    $region107: #{hpdm_forward.1} parent=1 // pred_check_branch
      %1210 = sbr.rel (0) target = $region109
    $region108: #{hpdm_forward.1} parent=1 // pred_region
      _
    $region109: #{hpdm_forward.1} parent=1 // pred_fallthru
      _
    // Predicated region
    $region110: #{hpdm_forward.1} parent=1 // pred_check
      _
    $region111: #{hpdm_forward.1} parent=1 // pred_check_branch
      %1212 = sbr.rel (0) target = $region113
    $region112: #{hpdm_forward.1} parent=1 // pred_region
      _
    $region113: #{hpdm_forward.1} parent=1 // pred_fallthru
      _
    %1213 = vsyncpa [#allocation3], 1
    %1214 = vsyncpa [#allocation5], 1
    %1215 = vsyncpa [#allocation8], 1

</llo_original>
